<compile_context>
chip_gen: v7x
topology: tpu7x:2x2x1
jax: 0.10.0
libtpu: 0.0.40
codegen_flags: <defaults>
</compile_context>

<pallas_src>
import functools

import jax
import jax.numpy as jnp
import numpy as np
from jax import lax
from jax.experimental import pallas as pl
from jax.experimental.pallas import tpu as pltpu


def _residual_block_kernel(x_ref, xt_ref, xb_ref, w3_ref, b3_ref, w1_ref,
                           b1_ref, out_ref, xcat):
    """One (batch, row-tile) block of the residual-block output.

    x_ref  : (1, TH, W, C) f32   raw input row tile
    xt_ref : (1, 1, W, C)  f32   raw row above the tile (clamped at row 0)
    xb_ref : (1, 1, W, C)  f32   raw row below the tile (clamped at row H-1)
    w3_ref : (3, 3C, C)    bf16  3x3 taps, dj-concatenated along K (dj-major)
    b3_ref : (1, C)        f32
    w1_ref : (C, C)        bf16  1x1 conv weights (Cin, Cout)
    b1_ref : (1, C)        f32
    out_ref: (1, TH, W, C) f32   output row tile
    xcat   : (TH+2, W, 3C) bf16  scratch: dj-shifted ReLU(x), zero padded
    """
    _, TH, W, C = x_ref.shape
    C2, C3 = 2 * C, 3 * C
    i = pl.program_id(1)
    last = pl.num_programs(1) - 1

    # One-time init of the static zero-pad columns (left col of the dj=0
    # group, right col of the dj=2 group).  Safe because grid axis 1 is
    # "arbitrary" (sequential, i==0 runs first on each core / image) and no
    # other store ever touches these (column, lane-group) locations.
    @pl.when(i == 0)
    def _():
        zc = jnp.zeros((TH + 2, 1, C), dtype=xcat.dtype)
        xcat[:, 0:1, 0:C] = zc
        xcat[:, W - 1:W, C2:C3] = zc

    # Interior rows: fused ReLU + bf16 downcast, stored as 3 dj-shifted
    # channel groups on the lane axis.
    x_core = x_ref[...][0]                                     # (TH, W, C) f32
    xc = jnp.maximum(x_core, 0.0).astype(xcat.dtype)           # (TH, W, C) bf16
    xcat[1:TH + 1, :, C:C2] = xc                               # dj = 1 (center)
    xcat[1:TH + 1, 1:W, 0:C] = xc[:, 0:W - 1, :]               # dj = 0 (left)
    xcat[1:TH + 1, 0:W - 1, C2:C3] = xc[:, 1:W, :]             # dj = 2 (right)

    # Top halo row (xcat row 0): previous image row, or zeros at the boundary.
    @pl.when(i == 0)
    def _():
        xcat[0:1, :, :] = jnp.zeros((1, W, C3), dtype=xcat.dtype)

    @pl.when(i > 0)
    def _():
        t = jnp.maximum(xt_ref[...][0], 0.0).astype(xcat.dtype)   # (1, W, C)
        xcat[0:1, :, C:C2] = t
        xcat[0:1, 1:W, 0:C] = t[:, 0:W - 1, :]
        xcat[0:1, 0:W - 1, C2:C3] = t[:, 1:W, :]

    # Bottom halo row (xcat row TH+1): next image row, or boundary zeros.
    @pl.when(i == last)
    def _():
        xcat[TH + 1:TH + 2, :, :] = jnp.zeros((1, W, C3), dtype=xcat.dtype)

    @pl.when(i < last)
    def _():
        btm = jnp.maximum(xb_ref[...][0], 0.0).astype(xcat.dtype)  # (1, W, C)
        xcat[TH + 1:TH + 2, :, C:C2] = btm
        xcat[TH + 1:TH + 2, 1:W, 0:C] = btm[:, 0:W - 1, :]
        xcat[TH + 1:TH + 2, 0:W - 1, C2:C3] = btm[:, 1:W, :]

    # ---- 3x3 "same" conv as 3 MXU matmuls with K = 3C (f32 accumulation) ----
    w3 = w3_ref[...]                                           # (3, 3C, C) bf16
    patch0 = xcat[0:TH, :, :].reshape(TH * W, C3)
    acc = jnp.dot(patch0, w3[0], preferred_element_type=jnp.float32)
    acc = acc + b3_ref[...]
    for di in (1, 2):
        patch = xcat[di:di + TH, :, :].reshape(TH * W, C3)
        acc = acc + jnp.dot(patch, w3[di], preferred_element_type=jnp.float32)

    # ---- ReLU -> 1x1 conv -> residual add ------------------------------------
    h = jnp.maximum(acc, 0.0).astype(jnp.bfloat16)
    y = jnp.dot(h, w1_ref[...], preferred_element_type=jnp.float32) + b1_ref[...]
    out_ref[...] = (x_core + y.reshape(TH, W, C))[None].astype(out_ref.dtype)


def _pick_tile_h(H, W, C, target_m=512, max_tile_bytes=2 << 20):
    """Divisor of H with matmul M = tile_h*W >= target_m when possible,
    and per-tile f32 bytes bounded (keeps per-step VMEM modest)."""
    divisors = [d for d in range(1, H + 1) if H % d == 0]
    fitting = [d for d in divisors if d * W * C * 4 <= max_tile_bytes]
    if not fitting:
        return 1
    for d in fitting:                 # smallest tile that reaches the M target
        if d * W >= target_m:
            return d
    return fitting[-1]                # otherwise the largest fitting tile


def _vmem_limit_bytes(H, W, C, tile_h):
    """Generation-aware VMEM request with headroom for compiler scratch."""
    blk = tile_h * W * C * 4                       # main input / output block
    halo = 2 * W * C * 4                           # two 1-row halo blocks
    weights = (9 * C * C + C * C) * 2 + 2 * C * 4  # bf16 weights + f32 biases
    scratch = (tile_h + 2) * W * 3 * C * 2         # bf16 xcat scratch
    est = 2 * (2 * blk + halo + weights) + scratch # double-buffered specs
    try:
        cap = pltpu.get_tpu_info().vmem_capacity_bytes  # 64 MiB/TC v7x, 128 MiB v5e/v6e
    except Exception:
        cap = 64 << 20
    return int(min(int(cap * 0.75), max(32 << 20, 4 * est)))


@functools.partial(jax.jit, static_argnames=("tile_h",))
def residual_block_forward(x_nchw, w3_oihw, b3, w1_oihw, b1, tile_h=None):
    """PyTorch-semantics ResidualBlock forward. x_nchw: (B, C, H, W) float32."""
    B, C, H, W = x_nchw.shape
    if W < 2:
        raise ValueError("W must be >= 2")
    if tile_h is None:
        tile_h = _pick_tile_h(H, W, C)
    if H % tile_h != 0:
        raise ValueError(f"tile_h={tile_h} must divide H={H}")
    n_row_tiles = H // tile_h

    # NCHW -> NHWC (channels on the lane axis).  No HBM-side padding.
    x_nhwc = jnp.transpose(x_nchw, (0, 2, 3, 1))

    # 3x3 weights: (Cout, Cin, kh, kw) -> (kh, kw, Cin, Cout) -> per-kh a
    # dj-concatenated (3C, C) bf16 matrix; K ordering (dj-major, cin-minor)
    # matches the lane layout of the xcat scratch.
    w3cat = jnp.transpose(w3_oihw, (2, 3, 1, 0)).reshape(3, 3 * C, C)
    w3cat = w3cat.astype(jnp.bfloat16)
    w1_mat = jnp.transpose(w1_oihw[:, :, 0, 0], (1, 0)).astype(jnp.bfloat16)
    b3_2d = b3.reshape(1, C).astype(jnp.float32)
    b1_2d = b1.reshape(1, C).astype(jnp.float32)

    out_nhwc = pl.pallas_call(
        _residual_block_kernel,
        out_shape=jax.ShapeDtypeStruct((B, H, W, C), x_nchw.dtype),
        grid_spec=pltpu.PrefetchScalarGridSpec(
            num_scalar_prefetch=0,
            grid=(B, n_row_tiles),
            in_specs=[
                # main row tile
                pl.BlockSpec((1, tile_h, W, C), lambda b, i: (b, i, 0, 0)),
                # 1-row top halo (clamped at the top image boundary)
                pl.BlockSpec(
                    (1, 1, W, C),
                    lambda b, i: (b, jnp.maximum(i * tile_h - 1, 0), 0, 0)),
                # 1-row bottom halo (clamped at the bottom image boundary)
                pl.BlockSpec(
                    (1, 1, W, C),
                    lambda b, i: (b, jnp.minimum((i + 1) * tile_h, H - 1), 0, 0)),
                pl.BlockSpec((3, 3 * C, C), lambda b, i: (0, 0, 0)),
                pl.BlockSpec((1, C), lambda b, i: (0, 0)),
                pl.BlockSpec((C, C), lambda b, i: (0, 0)),
                pl.BlockSpec((1, C), lambda b, i: (0, 0)),
            ],
            out_specs=pl.BlockSpec((1, tile_h, W, C), lambda b, i: (b, i, 0, 0)),
            scratch_shapes=[pltpu.VMEM((tile_h + 2, W, 3 * C), jnp.bfloat16)],
        ),
        compiler_params=pltpu.CompilerParams(
            # Batch-parallel only: on v7x the two TensorCores split images,
            # never row tiles (keeps the i==0 scratch init correct and avoids
            # duplicated halo traffic); the row-tile axis is sequential.
            dimension_semantics=("parallel", "arbitrary"),
            vmem_limit_bytes=_vmem_limit_bytes(H, W, C, tile_h),
        ),
    )(x_nhwc, x_nhwc, x_nhwc, w3cat, b3_2d, w1_mat, b1_2d)

    # NHWC -> NCHW to match the PyTorch module's output convention.
    return jnp.transpose(out_nhwc, (0, 3, 1, 2))


def _reference_forward(x_nchw, w3_oihw, b3, w1_oihw, b1):
    """Pure-JAX reference (lax.conv, f32) for validation."""
    x_nhwc = jnp.transpose(x_nchw, (0, 2, 3, 1))
    dn = lax.conv_dimension_numbers(x_nhwc.shape, (3, 3, 1, 1), ("NHWC", "HWIO", "NHWC"))
    w3_hwio = jnp.transpose(w3_oihw, (2, 3, 1, 0))
    w1_hwio = jnp.transpose(w1_oihw, (2, 3, 1, 0))
    h = jnp.maximum(x_nhwc, 0.0)
    h = lax.conv_general_dilated(h, w3_hwio, (1, 1), "SAME", dimension_numbers=dn) + b3
    h = jnp.maximum(h, 0.0)
    dn1 = lax.conv_dimension_numbers(h.shape, (1, 1, 1, 1), ("NHWC", "HWIO", "NHWC"))
    h = lax.conv_general_dilated(h, w1_hwio, (1, 1), "SAME", dimension_numbers=dn1) + b1
    return jnp.transpose(x_nhwc + h, (0, 3, 1, 2))


if __name__ == "__main__":
    B, C, H, W = 2, 4, 16, 16  # small shapes consistent with Conv2d(channels, channels)

    key = jax.random.PRNGKey(0)
    k_x, k_w3, k_b3, k_w1, k_b1 = jax.random.split(key, 5)

    x = jax.random.normal(k_x, (B, C, H, W), dtype=jnp.float32)

    # Deterministic parameter init (PyTorch-like uniform bounds, synthetic).
    fan3 = C * 3 * 3
    bound3 = 1.0 / np.sqrt(fan3)
    w3 = jax.random.uniform(k_w3, (C, C, 3, 3), jnp.float32, -bound3, bound3)
    b3 = jax.random.uniform(k_b3, (C,), jnp.float32, -bound3, bound3)

    fan1 = C * 1 * 1
    bound1 = 1.0 / np.sqrt(fan1)
    w1 = jax.random.uniform(k_w1, (C, C, 1, 1), jnp.float32, -bound1, bound1)
    b1 = jax.random.uniform(k_b1, (C,), jnp.float32, -bound1, bound1)

    # Default tiling: tile_h = 16 -> one row tile per image, matmul M = 256.
    out1 = jax.block_until_ready(residual_block_forward(x, w3, b3, w1, b1))
    # Explicit tile_h = 8 -> grid (B, 2): exercises both halo-row code paths.
    out2 = jax.block_until_ready(residual_block_forward(x, w3, b3, w1, b1, tile_h=8))

    ref = jax.block_until_ready(_reference_forward(x, w3, b3, w1, b1))
    # bf16 matmul operands (f32 accumulate) vs. an all-f32 lax.conv reference.
    np.testing.assert_allclose(np.asarray(out1), np.asarray(ref), rtol=2e-2, atol=2e-2)
    np.testing.assert_allclose(np.asarray(out2), np.asarray(ref), rtol=2e-2, atol=2e-2)

    print("KERNEL_OK")
</pallas_src>

<mosaic_0001>
module attributes {stable_mosaic.version = 11 : i64} {
  func.func @_residual_block_kernel(%arg0: i32, %arg1: i32, %arg2: memref<1x16x16x4xf32, #tpu.memory_space<vmem>>, %arg3: memref<1x1x16x4xf32, #tpu.memory_space<vmem>>, %arg4: memref<1x1x16x4xf32, #tpu.memory_space<vmem>>, %arg5: memref<3x12x4xbf16, #tpu.memory_space<vmem>>, %arg6: memref<1x4xf32, #tpu.memory_space<vmem>>, %arg7: memref<4x4xbf16, #tpu.memory_space<vmem>>, %arg8: memref<1x4xf32, #tpu.memory_space<vmem>>, %arg9: memref<1x16x16x4xf32, #tpu.memory_space<vmem>>, %arg10: memref<18x16x12xbf16, #tpu.memory_space<vmem>>) attributes {dimension_semantics = [#tpu.dimension_semantics<parallel>, #tpu.dimension_semantics<arbitrary>], iteration_bounds = array<i64: 2, 1>, scalar_prefetch = 0 : i64, scratch_operands = 1 : i64, tpu.core_type = #tpu.core_type<tc>, window_params = [{transform_indices = @transform_0, window_bounds = array<i64: 1, 16, 16, 4>}, {transform_indices = @transform_1, window_bounds = array<i64: 1, 1, 16, 4>}, {transform_indices = @transform_2, window_bounds = array<i64: 1, 1, 16, 4>}, {pipeline_mode = #tpu.pipeline_mode<synchronous>, transform_indices = @transform_3, window_bounds = array<i64: 3, 12, 4>}, {pipeline_mode = #tpu.pipeline_mode<synchronous>, transform_indices = @transform_4, window_bounds = array<i64: 1, 4>}, {pipeline_mode = #tpu.pipeline_mode<synchronous>, transform_indices = @transform_5, window_bounds = array<i64: 4, 4>}, {pipeline_mode = #tpu.pipeline_mode<synchronous>, transform_indices = @transform_6, window_bounds = array<i64: 1, 4>}, {transform_indices = @transform_7, window_bounds = array<i64: 1, 16, 16, 4>}]} {
    %c0_i32 = arith.constant 0 : i32
    %0 = arith.cmpi eq, %arg1, %c0_i32 : i32
    %1 = arith.extui %0 : i1 to i32
    %c0_i32_0 = arith.constant 0 : i32
    %2 = arith.cmpi ne, %1, %c0_i32_0 : i32
    scf.if %2 {
      %cst_44 = arith.constant 0.000000e+00 : bf16
      %58 = vector.broadcast %cst_44 : bf16 to vector<18x1x4xbf16>
      %c0_45 = arith.constant 0 : index
      %c0_46 = arith.constant 0 : index
      %c0_47 = arith.constant 0 : index
      %59 = vector.load %arg10[%c0_45, %c0_46, %c0_47] : memref<18x16x12xbf16, #tpu.memory_space<vmem>>, vector<18x1x4xbf16>
      tpu.vector_store %arg10[%c0_45, %c0_46, %c0_47], %58 {strides = array<i32>} : memref<18x16x12xbf16, #tpu.memory_space<vmem>>, vector<18x1x4xbf16>,
      %c0_48 = arith.constant 0 : index
      %c15 = arith.constant 15 : index
      %c8_49 = arith.constant 8 : index
      %60 = vector.load %arg10[%c0_48, %c15, %c8_49] : memref<18x16x12xbf16, #tpu.memory_space<vmem>>, vector<18x1x4xbf16>
      tpu.vector_store %arg10[%c0_48, %c15, %c8_49], %58 {strides = array<i32>} : memref<18x16x12xbf16, #tpu.memory_space<vmem>>, vector<18x1x4xbf16>,
    } else {
    }
    %c0 = arith.constant 0 : index
    %c0_1 = arith.constant 0 : index
    %c0_2 = arith.constant 0 : index
    %c0_3 = arith.constant 0 : index
    %3 = vector.load %arg2[%c0, %c0_1, %c0_2, %c0_3] : memref<1x16x16x4xf32, #tpu.memory_space<vmem>>, vector<1x16x16x4xf32>
    %4 = vector.shape_cast %3 : vector<1x16x16x4xf32> to vector<16x16x4xf32>
    %cst = arith.constant 0.000000e+00 : f32
    %5 = vector.broadcast %cst : f32 to vector<16x16x4xf32>
    %6 = arith.maximumf %4, %5 : vector<16x16x4xf32>
    %7 = arith.truncf %6 : vector<16x16x4xf32> to vector<16x16x4xbf16>
    %c1 = arith.constant 1 : index
    %c0_4 = arith.constant 0 : index
    %c4 = arith.constant 4 : index
    %8 = vector.load %arg10[%c1, %c0_4, %c4] : memref<18x16x12xbf16, #tpu.memory_space<vmem>>, vector<16x16x4xbf16>
    tpu.vector_store %arg10[%c1, %c0_4, %c4], %7 {strides = array<i32>} : memref<18x16x12xbf16, #tpu.memory_space<vmem>>, vector<16x16x4xbf16>,
    %9 = vector.extract_strided_slice %7 {offsets = [0, 0, 0], sizes = [16, 15, 4], strides = [1, 1, 1]} : vector<16x16x4xbf16> to vector<16x15x4xbf16>
    %c1_5 = arith.constant 1 : index
    %c1_6 = arith.constant 1 : index
    %c0_7 = arith.constant 0 : index
    %10 = vector.load %arg10[%c1_5, %c1_6, %c0_7] : memref<18x16x12xbf16, #tpu.memory_space<vmem>>, vector<16x15x4xbf16>
    tpu.vector_store %arg10[%c1_5, %c1_6, %c0_7], %9 {strides = array<i32>} : memref<18x16x12xbf16, #tpu.memory_space<vmem>>, vector<16x15x4xbf16>,
    %11 = vector.extract_strided_slice %7 {offsets = [0, 1, 0], sizes = [16, 15, 4], strides = [1, 1, 1]} : vector<16x16x4xbf16> to vector<16x15x4xbf16>
    %c1_8 = arith.constant 1 : index
    %c0_9 = arith.constant 0 : index
    %c8 = arith.constant 8 : index
    %12 = vector.load %arg10[%c1_8, %c0_9, %c8] : memref<18x16x12xbf16, #tpu.memory_space<vmem>>, vector<16x15x4xbf16>
    tpu.vector_store %arg10[%c1_8, %c0_9, %c8], %11 {strides = array<i32>} : memref<18x16x12xbf16, #tpu.memory_space<vmem>>, vector<16x15x4xbf16>,
    %c0_i32_10 = arith.constant 0 : i32
    %13 = arith.cmpi eq, %arg1, %c0_i32_10 : i32
    %14 = arith.extui %13 : i1 to i32
    %c0_i32_11 = arith.constant 0 : i32
    %15 = arith.cmpi ne, %14, %c0_i32_11 : i32
    scf.if %15 {
      %cst_44 = arith.constant 0.000000e+00 : bf16
      %58 = vector.broadcast %cst_44 : bf16 to vector<1x16x12xbf16>
      %c0_45 = arith.constant 0 : index
      %c0_46 = arith.constant 0 : index
      %c0_47 = arith.constant 0 : index
      %59 = vector.load %arg10[%c0_45, %c0_46, %c0_47] : memref<18x16x12xbf16, #tpu.memory_space<vmem>>, vector<1x16x12xbf16>
      tpu.vector_store %arg10[%c0_45, %c0_46, %c0_47], %58 {strides = array<i32>} : memref<18x16x12xbf16, #tpu.memory_space<vmem>>, vector<1x16x12xbf16>,
    } else {
    }
    %c0_i32_12 = arith.constant 0 : i32
    %16 = arith.cmpi sgt, %arg1, %c0_i32_12 : i32
    %17 = arith.extui %16 : i1 to i32
    %c0_i32_13 = arith.constant 0 : i32
    %18 = arith.cmpi ne, %17, %c0_i32_13 : i32
    scf.if %18 {
      %c0_44 = arith.constant 0 : index
      %c0_45 = arith.constant 0 : index
      %c0_46 = arith.constant 0 : index
      %c0_47 = arith.constant 0 : index
      %58 = vector.load %arg3[%c0_44, %c0_45, %c0_46, %c0_47] : memref<1x1x16x4xf32, #tpu.memory_space<vmem>>, vector<1x1x16x4xf32>
      %59 = vector.shape_cast %58 : vector<1x1x16x4xf32> to vector<1x16x4xf32>
      %cst_48 = arith.constant 0.000000e+00 : f32
      %60 = vector.broadcast %cst_48 : f32 to vector<1x16x4xf32>
      %61 = arith.maximumf %59, %60 : vector<1x16x4xf32>
      %62 = arith.truncf %61 : vector<1x16x4xf32> to vector<1x16x4xbf16>
      %c0_49 = arith.constant 0 : index
      %c0_50 = arith.constant 0 : index
      %c4_51 = arith.constant 4 : index
      %63 = vector.load %arg10[%c0_49, %c0_50, %c4_51] : memref<18x16x12xbf16, #tpu.memory_space<vmem>>, vector<1x16x4xbf16>
      tpu.vector_store %arg10[%c0_49, %c0_50, %c4_51], %62 {strides = array<i32>} : memref<18x16x12xbf16, #tpu.memory_space<vmem>>, vector<1x16x4xbf16>,
      %64 = vector.extract_strided_slice %62 {offsets = [0, 0, 0], sizes = [1, 15, 4], strides = [1, 1, 1]} : vector<1x16x4xbf16> to vector<1x15x4xbf16>
      %c0_52 = arith.constant 0 : index
      %c1_53 = arith.constant 1 : index
      %c0_54 = arith.constant 0 : index
      %65 = vector.load %arg10[%c0_52, %c1_53, %c0_54] : memref<18x16x12xbf16, #tpu.memory_space<vmem>>, vector<1x15x4xbf16>
      tpu.vector_store %arg10[%c0_52, %c1_53, %c0_54], %64 {strides = array<i32>} : memref<18x16x12xbf16, #tpu.memory_space<vmem>>, vector<1x15x4xbf16>,
      %66 = vector.extract_strided_slice %62 {offsets = [0, 1, 0], sizes = [1, 15, 4], strides = [1, 1, 1]} : vector<1x16x4xbf16> to vector<1x15x4xbf16>
      %c0_55 = arith.constant 0 : index
      %c0_56 = arith.constant 0 : index
      %c8_57 = arith.constant 8 : index
      %67 = vector.load %arg10[%c0_55, %c0_56, %c8_57] : memref<18x16x12xbf16, #tpu.memory_space<vmem>>, vector<1x15x4xbf16>
      tpu.vector_store %arg10[%c0_55, %c0_56, %c8_57], %66 {strides = array<i32>} : memref<18x16x12xbf16, #tpu.memory_space<vmem>>, vector<1x15x4xbf16>,
    } else {
    }
    %c0_i32_14 = arith.constant 0 : i32
    %19 = arith.cmpi eq, %arg1, %c0_i32_14 : i32
    %20 = arith.extui %19 : i1 to i32
    %c0_i32_15 = arith.constant 0 : i32
    %21 = arith.cmpi ne, %20, %c0_i32_15 : i32
    scf.if %21 {
      %cst_44 = arith.constant 0.000000e+00 : bf16
      %58 = vector.broadcast %cst_44 : bf16 to vector<1x16x12xbf16>
      %c17 = arith.constant 17 : index
      %c0_45 = arith.constant 0 : index
      %c0_46 = arith.constant 0 : index
      %59 = vector.load %arg10[%c17, %c0_45, %c0_46] : memref<18x16x12xbf16, #tpu.memory_space<vmem>>, vector<1x16x12xbf16>
      tpu.vector_store %arg10[%c17, %c0_45, %c0_46], %58 {strides = array<i32>} : memref<18x16x12xbf16, #tpu.memory_space<vmem>>, vector<1x16x12xbf16>,
    } else {
    }
    %c0_i32_16 = arith.constant 0 : i32
    %22 = arith.cmpi slt, %arg1, %c0_i32_16 : i32
    %23 = arith.extui %22 : i1 to i32
    %c0_i32_17 = arith.constant 0 : i32
    %24 = arith.cmpi ne, %23, %c0_i32_17 : i32
    scf.if %24 {
      %c0_44 = arith.constant 0 : index
      %c0_45 = arith.constant 0 : index
      %c0_46 = arith.constant 0 : index
      %c0_47 = arith.constant 0 : index
      %58 = vector.load %arg4[%c0_44, %c0_45, %c0_46, %c0_47] : memref<1x1x16x4xf32, #tpu.memory_space<vmem>>, vector<1x1x16x4xf32>
      %59 = vector.shape_cast %58 : vector<1x1x16x4xf32> to vector<1x16x4xf32>
      %cst_48 = arith.constant 0.000000e+00 : f32
      %60 = vector.broadcast %cst_48 : f32 to vector<1x16x4xf32>
      %61 = arith.maximumf %59, %60 : vector<1x16x4xf32>
      %62 = arith.truncf %61 : vector<1x16x4xf32> to vector<1x16x4xbf16>
      %c17 = arith.constant 17 : index
      %c0_49 = arith.constant 0 : index
      %c4_50 = arith.constant 4 : index
      %63 = vector.load %arg10[%c17, %c0_49, %c4_50] : memref<18x16x12xbf16, #tpu.memory_space<vmem>>, vector<1x16x4xbf16>
      tpu.vector_store %arg10[%c17, %c0_49, %c4_50], %62 {strides = array<i32>} : memref<18x16x12xbf16, #tpu.memory_space<vmem>>, vector<1x16x4xbf16>,
      %64 = vector.extract_strided_slice %62 {offsets = [0, 0, 0], sizes = [1, 15, 4], strides = [1, 1, 1]} : vector<1x16x4xbf16> to vector<1x15x4xbf16>
      %c17_51 = arith.constant 17 : index
      %c1_52 = arith.constant 1 : index
      %c0_53 = arith.constant 0 : index
      %65 = vector.load %arg10[%c17_51, %c1_52, %c0_53] : memref<18x16x12xbf16, #tpu.memory_space<vmem>>, vector<1x15x4xbf16>
      tpu.vector_store %arg10[%c17_51, %c1_52, %c0_53], %64 {strides = array<i32>} : memref<18x16x12xbf16, #tpu.memory_space<vmem>>, vector<1x15x4xbf16>,
      %66 = vector.extract_strided_slice %62 {offsets = [0, 1, 0], sizes = [1, 15, 4], strides = [1, 1, 1]} : vector<1x16x4xbf16> to vector<1x15x4xbf16>
      %c17_54 = arith.constant 17 : index
      %c0_55 = arith.constant 0 : index
      %c8_56 = arith.constant 8 : index
      %67 = vector.load %arg10[%c17_54, %c0_55, %c8_56] : memref<18x16x12xbf16, #tpu.memory_space<vmem>>, vector<1x15x4xbf16>
      tpu.vector_store %arg10[%c17_54, %c0_55, %c8_56], %66 {strides = array<i32>} : memref<18x16x12xbf16, #tpu.memory_space<vmem>>, vector<1x15x4xbf16>,
    } else {
    }
    %c0_18 = arith.constant 0 : index
    %c0_19 = arith.constant 0 : index
    %c0_20 = arith.constant 0 : index
    %25 = vector.load %arg5[%c0_18, %c0_19, %c0_20] : memref<3x12x4xbf16, #tpu.memory_space<vmem>>, vector<3x12x4xbf16>
    %c0_21 = arith.constant 0 : index
    %c0_22 = arith.constant 0 : index
    %c0_23 = arith.constant 0 : index
    %26 = vector.load %arg10[%c0_21, %c0_22, %c0_23] : memref<18x16x12xbf16, #tpu.memory_space<vmem>>, vector<16x16x12xbf16>
    %27 = vector.shape_cast %26 : vector<16x16x12xbf16> to vector<256x12xbf16>
    %28 = vector.extract_strided_slice %25 {offsets = [0, 0, 0], sizes = [1, 12, 4], strides = [1, 1, 1]} : vector<3x12x4xbf16> to vector<1x12x4xbf16>
    %29 = vector.shape_cast %28 : vector<1x12x4xbf16> to vector<12x4xbf16>
    %cst_24 = arith.constant dense<0.000000e+00> : vector<256x4xf32>
    %30 = tpu.matmul %27, %29, %cst_24 {dimension_numbers = #tpu.dot_dimension_numbers<[1], [0], [0], [1], [0, 0, 1, 1], [], []>} : vector<256x12xbf16>, vector<12x4xbf16>, vector<256x4xf32> -> vector<256x4xf32>
    %c0_25 = arith.constant 0 : index
    %c0_26 = arith.constant 0 : index
    %31 = vector.load %arg6[%c0_25, %c0_26] : memref<1x4xf32, #tpu.memory_space<vmem>>, vector<1x4xf32>
    %32 = vector.broadcast %31 : vector<1x4xf32> to vector<256x4xf32>
    %33 = arith.addf %30, %32 : vector<256x4xf32>
    %c1_27 = arith.constant 1 : index
    %c0_28 = arith.constant 0 : index
    %c0_29 = arith.constant 0 : index
    %34 = vector.load %arg10[%c1_27, %c0_28, %c0_29] : memref<18x16x12xbf16, #tpu.memory_space<vmem>>, vector<16x16x12xbf16>
    %35 = vector.shape_cast %34 : vector<16x16x12xbf16> to vector<256x12xbf16>
    %36 = vector.extract_strided_slice %25 {offsets = [1, 0, 0], sizes = [1, 12, 4], strides = [1, 1, 1]} : vector<3x12x4xbf16> to vector<1x12x4xbf16>
    %37 = vector.shape_cast %36 : vector<1x12x4xbf16> to vector<12x4xbf16>
    %cst_30 = arith.constant dense<0.000000e+00> : vector<256x4xf32>
    %38 = tpu.matmul %35, %37, %cst_30 {dimension_numbers = #tpu.dot_dimension_numbers<[1], [0], [0], [1], [0, 0, 1, 1], [], []>} : vector<256x12xbf16>, vector<12x4xbf16>, vector<256x4xf32> -> vector<256x4xf32>
    %39 = arith.addf %33, %38 : vector<256x4xf32>
    %c2 = arith.constant 2 : index
    %c0_31 = arith.constant 0 : index
    %c0_32 = arith.constant 0 : index
    %40 = vector.load %arg10[%c2, %c0_31, %c0_32] : memref<18x16x12xbf16, #tpu.memory_space<vmem>>, vector<16x16x12xbf16>
    %41 = vector.shape_cast %40 : vector<16x16x12xbf16> to vector<256x12xbf16>
    %42 = vector.extract_strided_slice %25 {offsets = [2, 0, 0], sizes = [1, 12, 4], strides = [1, 1, 1]} : vector<3x12x4xbf16> to vector<1x12x4xbf16>
    %43 = vector.shape_cast %42 : vector<1x12x4xbf16> to vector<12x4xbf16>
    %cst_33 = arith.constant dense<0.000000e+00> : vector<256x4xf32>
    %44 = tpu.matmul %41, %43, %cst_33 {dimension_numbers = #tpu.dot_dimension_numbers<[1], [0], [0], [1], [0, 0, 1, 1], [], []>} : vector<256x12xbf16>, vector<12x4xbf16>, vector<256x4xf32> -> vector<256x4xf32>
    %45 = arith.addf %39, %44 : vector<256x4xf32>
    %cst_34 = arith.constant 0.000000e+00 : f32
    %46 = vector.broadcast %cst_34 : f32 to vector<256x4xf32>
    %47 = arith.maximumf %45, %46 : vector<256x4xf32>
    %48 = arith.truncf %47 : vector<256x4xf32> to vector<256x4xbf16>
    %c0_35 = arith.constant 0 : index
    %c0_36 = arith.constant 0 : index
    %49 = vector.load %arg7[%c0_35, %c0_36] : memref<4x4xbf16, #tpu.memory_space<vmem>>, vector<4x4xbf16>
    %cst_37 = arith.constant dense<0.000000e+00> : vector<256x4xf32>
    %50 = tpu.matmul %48, %49, %cst_37 {dimension_numbers = #tpu.dot_dimension_numbers<[1], [0], [0], [1], [0, 0, 1, 1], [], []>} : vector<256x4xbf16>, vector<4x4xbf16>, vector<256x4xf32> -> vector<256x4xf32>
    %c0_38 = arith.constant 0 : index
    %c0_39 = arith.constant 0 : index
    %51 = vector.load %arg8[%c0_38, %c0_39] : memref<1x4xf32, #tpu.memory_space<vmem>>, vector<1x4xf32>
    %52 = vector.broadcast %51 : vector<1x4xf32> to vector<256x4xf32>
    %53 = arith.addf %50, %52 : vector<256x4xf32>
    %54 = vector.shape_cast %53 : vector<256x4xf32> to vector<16x16x4xf32>
    %55 = arith.addf %4, %54 : vector<16x16x4xf32>
    %56 = vector.shape_cast %55 : vector<16x16x4xf32> to vector<1x16x16x4xf32>
    %c0_40 = arith.constant 0 : index
    %c0_41 = arith.constant 0 : index
    %c0_42 = arith.constant 0 : index
    %c0_43 = arith.constant 0 : index
    %57 = vector.load %arg9[%c0_40, %c0_41, %c0_42, %c0_43] : memref<1x16x16x4xf32, #tpu.memory_space<vmem>>, vector<1x16x16x4xf32>
    tpu.vector_store %arg9[%c0_40, %c0_41, %c0_42, %c0_43], %56 {strides = array<i32>} : memref<1x16x16x4xf32, #tpu.memory_space<vmem>>, vector<1x16x16x4xf32>,
    return
  }
  func.func @transform_0(%arg0: i32, %arg1: i32) -> (i32, i32, i32, i32) {
    %c0_i32 = arith.constant 0 : i32
    %c0_i32_0 = arith.constant 0 : i32
    %c0_i32_1 = arith.constant 0 : i32
    return %arg0, %arg1, %c0_i32, %c0_i32_0 : i32, i32, i32, i32
  }
  func.func @transform_1(%arg0: i32, %arg1: i32) -> (i32, i32, i32, i32) {
    %c16_i32 = arith.constant 16 : i32
    %0 = arith.muli %arg1, %c16_i32 : i32
    %c1_i32 = arith.constant 1 : i32
    %1 = arith.subi %0, %c1_i32 : i32
    %c0_i32 = arith.constant 0 : i32
    %2 = arith.maxsi %1, %c0_i32 : i32
    %c0_i32_0 = arith.constant 0 : i32
    %c0_i32_1 = arith.constant 0 : i32
    %c0_i32_2 = arith.constant 0 : i32
    return %arg0, %2, %c0_i32_0, %c0_i32_1 : i32, i32, i32, i32
  }
  func.func @transform_2(%arg0: i32, %arg1: i32) -> (i32, i32, i32, i32) {
    %c1_i32 = arith.constant 1 : i32
    %0 = arith.addi %arg1, %c1_i32 : i32
    %c16_i32 = arith.constant 16 : i32
    %1 = arith.muli %0, %c16_i32 : i32
    %c15_i32 = arith.constant 15 : i32
    %2 = arith.minsi %1, %c15_i32 : i32
    %c0_i32 = arith.constant 0 : i32
    %c0_i32_0 = arith.constant 0 : i32
    %c0_i32_1 = arith.constant 0 : i32
    return %arg0, %2, %c0_i32, %c0_i32_0 : i32, i32, i32, i32
  }
  func.func @transform_3(%arg0: i32, %arg1: i32) -> (i32, i32, i32) {
    %c0_i32 = arith.constant 0 : i32
    %c0_i32_0 = arith.constant 0 : i32
    %c0_i32_1 = arith.constant 0 : i32
    %c0_i32_2 = arith.constant 0 : i32
    return %c0_i32, %c0_i32_0, %c0_i32_1 : i32, i32, i32
  }
  func.func @transform_4(%arg0: i32, %arg1: i32) -> (i32, i32) {
    %c0_i32 = arith.constant 0 : i32
    %c0_i32_0 = arith.constant 0 : i32
    %c0_i32_1 = arith.constant 0 : i32
    return %c0_i32, %c0_i32_0 : i32, i32
  }
  func.func @transform_5(%arg0: i32, %arg1: i32) -> (i32, i32) {
    %c0_i32 = arith.constant 0 : i32
    %c0_i32_0 = arith.constant 0 : i32
    %c0_i32_1 = arith.constant 0 : i32
    return %c0_i32, %c0_i32_0 : i32, i32
  }
  func.func @transform_6(%arg0: i32, %arg1: i32) -> (i32, i32) {
    %c0_i32 = arith.constant 0 : i32
    %c0_i32_0 = arith.constant 0 : i32
    %c0_i32_1 = arith.constant 0 : i32
    return %c0_i32, %c0_i32_0 : i32, i32
  }
  func.func @transform_7(%arg0: i32, %arg1: i32) -> (i32, i32, i32, i32) {
    %c0_i32 = arith.constant 0 : i32
    %c0_i32_0 = arith.constant 0 : i32
    %c0_i32_1 = arith.constant 0 : i32
    return %arg0, %arg1, %c0_i32, %c0_i32_0 : i32, i32, i32, i32
  }
}

</mosaic_0001>

<llo_original>
// kernel: residual_block_forward.1
$region0: #{residual_block_forward.1}
  #allocation0 [shape = 'u32[]', space=smem, size = 0x4, offset = 0x4, fixed_abs, tag = 'smem constant byte address 0x4 - core index']
  #allocation1 [shape = 'u32[144,128]{1,0:T(1,128)}', space=vmem, size = 0x12000, scoped, tag = 'internal scratch']
  #allocation2 [shape = 'bf16[18,16,12]{2,1,0:T(16,128)(2,1)}', space=vmem, size = 0x12000, scoped, tag = 'scratch operand']
  %s0 = inlined_call_operand.vmem [shape: f32[2,16,16,4], index: 0, kind: input, shape index: {}, may-alias: {0,1,2}]
  %s1 = inlined_call_operand.vmem [shape: f32[2,16,16,4], index: 1, kind: input, shape index: {}, may-alias: {0,1,2}]
  %s2 = inlined_call_operand.vmem [shape: f32[2,16,16,4], index: 2, kind: input, shape index: {}, may-alias: {0,1,2}]
  %s3 = inlined_call_operand.vmem [shape: bf16[3,12,4], index: 3, kind: input, shape index: {}]
  %s4 = inlined_call_operand.vmem [shape: f32[1,4], index: 4, kind: input, shape index: {}]
  %s5 = inlined_call_operand.vmem [shape: bf16[4,4], index: 5, kind: input, shape index: {}]
  %s6 = inlined_call_operand.vmem [shape: f32[1,4], index: 6, kind: input, shape index: {}]
  %s7 = inlined_call_operand.vmem [shape: f32[2,16,16,4], index: 7, kind: output, shape index: {}]
  %s8 = sld [smem:[#allocation0]]
  $region81: #{residual_block_forward.1} parent=0
    _
  %s10 = ssub.s32 1, %s8
  %s11 = scalar_select 0, %s10, %s8
  loop: start=0, step=1, limit=4
  $region2: #{residual_block_forward.1} parent=0 // loop_pre_header
    _
  $region3: #{residual_block_forward.1} parent=0 // loop_header
    %s13 = sphi 0, %s17
    %p14 = scmp.ge.s32.totalorder %s13, 4
    %s20 = sphi 0, %s32
    %s21 = sphi 0, %s28
    %s22 = sphi 0, %s20
    %s23 = sphi 0, %s21
    %s24 = sphi 0, %s22
    %s25 = sphi 0, %s23
    %s37 = sphi 0, %s39
    %s40 = sphi 0, %s37
    %s41 = sphi 0, %s40
    %s57 = sphi 0, %s41
    %s73 = sphi 0, %s75
    %s76 = sphi 0, %s73
    %s77 = sphi 0, %s76
    %s93 = sphi 0, %s77
    %s109 = sphi 0, %s111
    %s112 = sphi 0, %s109
    %s113 = sphi 0, %s112
    %s129 = sphi 0, %s113
    %s133 = sphi 0, %s133
    %s135 = sphi 0, %s133
    %s136 = sphi 0, %s135
    %s150 = sphi 0, %s136
    %s154 = sphi 0, %s154
    %s156 = sphi 0, %s154
    %s157 = sphi 0, %s156
    %s171 = sphi 0, %s157
    %s175 = sphi 0, %s175
    %s177 = sphi 0, %s175
    %s178 = sphi 0, %s177
    %s192 = sphi 0, %s178
    %s196 = sphi 0, %s196
    %s198 = sphi 0, %s196
    %s199 = sphi 0, %s198
    %s213 = sphi 0, %s199
    %s221 = sphi 0, %s223
    %s224 = sphi 0, %s221
    %s225 = sphi 0, %s224
    %s241 = sphi 0, %s225
  $region4: #{residual_block_forward.1} parent=0 // loop_header_branch
    %16 = sbr.rel (%p14) target = $region8
  $region5: #{residual_block_forward.1} parent=0 // loop_body
    %s18 = ssub.s32 %s13, 1
    %s19 = ssub.s32 %s13, 2
    %s26 = sadd.s32 1, %s21
    %p27 = scmp.ge.s32.totalorder %s26, 1
    %s28 = scalar_select %p27, 0, %s26
    %s29 = sadd.s32 1, %s20
    %s30 = scalar_select %p27, %s29, %s20
    %p31 = scmp.ge.s32.totalorder %s30, 2
    %s32 = scalar_select %p31, 0, %s30
    %s33 = ssub.s32 %s20, %s32
    %s34 = ssub.s32 %s21, %s28
    %s35 = sor.u32 %s33, %s34
    %p36 = scmp.eq.s32.totalorder %s35, 0
    %s38 = sadd.s32 %s37, 1
    %s39 = scalar_select %p36, %s37, %s38
    %p42 = pneg %p36
    %p43 = scmp.eq.s32.totalorder %s13, 1
    %p44 = por %p42, %p43
    %p45 = scmp.ne.s32.totalorder %s37, %s40
    %p46 = scmp.eq.s32.totalorder %s13, 0
    %p47 = por %p45, %p46
    %p48 = scmp.ne.s32.totalorder %s37, %s40
    %p49 = scmp.eq.s32.totalorder %s18, 1
    %p50 = por %p48, %p49
    %p51 = scmp.ne.s32.totalorder %s40, %s41
    %p52 = scmp.eq.s32.totalorder %s18, 0
    %p53 = por %p51, %p52
    %p54 = scmp.ne.s32.totalorder %s40, %s41
    %p55 = scmp.eq.s32.totalorder %s19, 1
    %p56 = por %p54, %p55
    %p58 = scmp.ne.s32.totalorder %s41, %s57
    %p59 = scmp.eq.s32.totalorder %s19, 0
    %p60 = por %p58, %p59
    %s61 = smul.u32 %s21, 16
    %s62 = ssub.s32 %s61, 1
    %p63 = scmp.gt.s32.totalorder %s62, 0
    %s64 = scalar_select %p63, %s62, 0
    %s65 = smul.u32 %s28, 16
    %s66 = ssub.s32 %s65, 1
    %p67 = scmp.gt.s32.totalorder %s66, 0
    %s68 = scalar_select %p67, %s66, 0
    %s69 = ssub.s32 %s20, %s32
    %s70 = ssub.s32 %s64, %s68
    %s71 = sor.u32 %s69, %s70
    %p72 = scmp.eq.s32.totalorder %s71, 0
    %s74 = sadd.s32 %s73, 1
    %s75 = scalar_select %p72, %s73, %s74
    %p78 = pneg %p72
    %p79 = scmp.eq.s32.totalorder %s13, 1
    %p80 = por %p78, %p79
    %p81 = scmp.ne.s32.totalorder %s73, %s76
    %p82 = scmp.eq.s32.totalorder %s13, 0
    %p83 = por %p81, %p82
    %p84 = scmp.ne.s32.totalorder %s73, %s76
    %p85 = scmp.eq.s32.totalorder %s18, 1
    %p86 = por %p84, %p85
    %p87 = scmp.ne.s32.totalorder %s76, %s77
    %p88 = scmp.eq.s32.totalorder %s18, 0
    %p89 = por %p87, %p88
    %p90 = scmp.ne.s32.totalorder %s76, %s77
    %p91 = scmp.eq.s32.totalorder %s19, 1
    %p92 = por %p90, %p91
    %p94 = scmp.ne.s32.totalorder %s77, %s93
    %p95 = scmp.eq.s32.totalorder %s19, 0
    %p96 = por %p94, %p95
    %s97 = sadd.s32 %s21, 1
    %s98 = smul.u32 %s97, 16
    %p99 = scmp.lt.s32.totalorder %s98, 15
    %s100 = scalar_select %p99, %s98, 15
    %s101 = sadd.s32 %s28, 1
    %s102 = smul.u32 %s101, 16
    %p103 = scmp.lt.s32.totalorder %s102, 15
    %s104 = scalar_select %p103, %s102, 15
    %s105 = ssub.s32 %s20, %s32
    %s106 = ssub.s32 %s100, %s104
    %s107 = sor.u32 %s105, %s106
    %p108 = scmp.eq.s32.totalorder %s107, 0
    %s110 = sadd.s32 %s109, 1
    %s111 = scalar_select %p108, %s109, %s110
    %p114 = pneg %p108
    %p115 = scmp.eq.s32.totalorder %s13, 1
    %p116 = por %p114, %p115
    %p117 = scmp.ne.s32.totalorder %s109, %s112
    %p118 = scmp.eq.s32.totalorder %s13, 0
    %p119 = por %p117, %p118
    %p120 = scmp.ne.s32.totalorder %s109, %s112
    %p121 = scmp.eq.s32.totalorder %s18, 1
    %p122 = por %p120, %p121
    %p123 = scmp.ne.s32.totalorder %s112, %s113
    %p124 = scmp.eq.s32.totalorder %s18, 0
    %p125 = por %p123, %p124
    %p126 = scmp.ne.s32.totalorder %s112, %s113
    %p127 = scmp.eq.s32.totalorder %s19, 1
    %p128 = por %p126, %p127
    %p130 = scmp.ne.s32.totalorder %s113, %s129
    %p131 = scmp.eq.s32.totalorder %s19, 0
    %p132 = por %p130, %p131
    %s134 = sadd.s32 %s133, 1
    %p137 = scmp.eq.s32.totalorder %s13, 1
    %p138 = scmp.ne.s32.totalorder %s133, %s135
    %p139 = scmp.eq.s32.totalorder %s13, 0
    %p140 = por %p138, %p139
    %p141 = scmp.ne.s32.totalorder %s133, %s135
    %p142 = scmp.eq.s32.totalorder %s18, 1
    %p143 = por %p141, %p142
    %p144 = scmp.ne.s32.totalorder %s135, %s136
    %p145 = scmp.eq.s32.totalorder %s18, 0
    %p146 = por %p144, %p145
    %p147 = scmp.ne.s32.totalorder %s135, %s136
    %p148 = scmp.eq.s32.totalorder %s19, 1
    %p149 = por %p147, %p148
    %p151 = scmp.ne.s32.totalorder %s136, %s150
    %p152 = scmp.eq.s32.totalorder %s19, 0
    %p153 = por %p151, %p152
    %s155 = sadd.s32 %s154, 1
    %p158 = scmp.eq.s32.totalorder %s13, 1
    %p159 = scmp.ne.s32.totalorder %s154, %s156
    %p160 = scmp.eq.s32.totalorder %s13, 0
    %p161 = por %p159, %p160
    %p162 = scmp.ne.s32.totalorder %s154, %s156
    %p163 = scmp.eq.s32.totalorder %s18, 1
    %p164 = por %p162, %p163
    %p165 = scmp.ne.s32.totalorder %s156, %s157
    %p166 = scmp.eq.s32.totalorder %s18, 0
    %p167 = por %p165, %p166
    %p168 = scmp.ne.s32.totalorder %s156, %s157
    %p169 = scmp.eq.s32.totalorder %s19, 1
    %p170 = por %p168, %p169
    %p172 = scmp.ne.s32.totalorder %s157, %s171
    %p173 = scmp.eq.s32.totalorder %s19, 0
    %p174 = por %p172, %p173
    %s176 = sadd.s32 %s175, 1
    %p179 = scmp.eq.s32.totalorder %s13, 1
    %p180 = scmp.ne.s32.totalorder %s175, %s177
    %p181 = scmp.eq.s32.totalorder %s13, 0
    %p182 = por %p180, %p181
    %p183 = scmp.ne.s32.totalorder %s175, %s177
    %p184 = scmp.eq.s32.totalorder %s18, 1
    %p185 = por %p183, %p184
    %p186 = scmp.ne.s32.totalorder %s177, %s178
    %p187 = scmp.eq.s32.totalorder %s18, 0
    %p188 = por %p186, %p187
    %p189 = scmp.ne.s32.totalorder %s177, %s178
    %p190 = scmp.eq.s32.totalorder %s19, 1
    %p191 = por %p189, %p190
    %p193 = scmp.ne.s32.totalorder %s178, %s192
    %p194 = scmp.eq.s32.totalorder %s19, 0
    %p195 = por %p193, %p194
    %s197 = sadd.s32 %s196, 1
    %p200 = scmp.eq.s32.totalorder %s13, 1
    %p201 = scmp.ne.s32.totalorder %s196, %s198
    %p202 = scmp.eq.s32.totalorder %s13, 0
    %p203 = por %p201, %p202
    %p204 = scmp.ne.s32.totalorder %s196, %s198
    %p205 = scmp.eq.s32.totalorder %s18, 1
    %p206 = por %p204, %p205
    %p207 = scmp.ne.s32.totalorder %s198, %s199
    %p208 = scmp.eq.s32.totalorder %s18, 0
    %p209 = por %p207, %p208
    %p210 = scmp.ne.s32.totalorder %s198, %s199
    %p211 = scmp.eq.s32.totalorder %s19, 1
    %p212 = por %p210, %p211
    %p214 = scmp.ne.s32.totalorder %s199, %s213
    %p215 = scmp.eq.s32.totalorder %s19, 0
    %p216 = por %p214, %p215
    %s217 = ssub.s32 %s20, %s32
    %s218 = ssub.s32 %s21, %s28
    %s219 = sor.u32 %s217, %s218
    %p220 = scmp.eq.s32.totalorder %s219, 0
    %s222 = sadd.s32 %s221, 1
    %s223 = scalar_select %p220, %s221, %s222
    %p226 = pneg %p220
    %p227 = scmp.eq.s32.totalorder %s13, 1
    %p228 = por %p226, %p227
    %p229 = scmp.ne.s32.totalorder %s221, %s224
    %p230 = scmp.eq.s32.totalorder %s13, 0
    %p231 = por %p229, %p230
    %p232 = scmp.ne.s32.totalorder %s221, %s224
    %p233 = scmp.eq.s32.totalorder %s18, 1
    %p234 = por %p232, %p233
    %p235 = scmp.ne.s32.totalorder %s224, %s225
    %p236 = scmp.eq.s32.totalorder %s18, 0
    %p237 = por %p235, %p236
    %p238 = scmp.ne.s32.totalorder %s224, %s225
    %p239 = scmp.eq.s32.totalorder %s19, 1
    %p240 = por %p238, %p239
    %p242 = scmp.ne.s32.totalorder %s225, %s241
    %p243 = scmp.eq.s32.totalorder %s19, 0
    %p244 = por %p242, %p243
    %p245 = scmp.le.s32.totalorder 1, %s13
    %p246 = scmp.lt.s32.totalorder %s13, 3
    %p247 = pnand %p245, %p246
    %p248 = pneg %p247
    // Predicated region
    $region9: #{residual_block_forward.1} parent=5 // pred_check
      _
    $region10: #{residual_block_forward.1} parent=5 // pred_check_branch
      %250 = sbr.rel (%p247) target = $region12
    $region11: #{residual_block_forward.1} parent=5 // pred_region
      %s251 = ssub.s32 %s13, 1
      // Predicated region
      $region13: #{residual_block_forward.1} parent=11 // pred_check
        %p252 = pneg %p146
      $region14: #{residual_block_forward.1} parent=11 // pred_check_branch
        %254 = sbr.rel (%p252) target = $region16
      $region15: #{residual_block_forward.1} parent=11 // pred_region
        _
      $region16: #{residual_block_forward.1} parent=11 // pred_fallthru
        _
      // Predicated region
      $region17: #{residual_block_forward.1} parent=11 // pred_check
        %p255 = pneg %p167
      $region18: #{residual_block_forward.1} parent=11 // pred_check_branch
        %257 = sbr.rel (%p255) target = $region20
      $region19: #{residual_block_forward.1} parent=11 // pred_region
        _
      $region20: #{residual_block_forward.1} parent=11 // pred_fallthru
        _
      // Predicated region
      $region21: #{residual_block_forward.1} parent=11 // pred_check
        %p258 = pneg %p188
      $region22: #{residual_block_forward.1} parent=11 // pred_check_branch
        %260 = sbr.rel (%p258) target = $region24
      $region23: #{residual_block_forward.1} parent=11 // pred_region
        _
      $region24: #{residual_block_forward.1} parent=11 // pred_fallthru
        _
      // Predicated region
      $region25: #{residual_block_forward.1} parent=11 // pred_check
        %p261 = pneg %p209
      $region26: #{residual_block_forward.1} parent=11 // pred_check_branch
        %263 = sbr.rel (%p261) target = $region28
      $region27: #{residual_block_forward.1} parent=11 // pred_region
        _
      $region28: #{residual_block_forward.1} parent=11 // pred_fallthru
        _
    $region12: #{residual_block_forward.1} parent=5 // pred_fallthru
      _
    %p264 = scmp.lt.s32.totalorder %s13, 2
    // Predicated region
    $region29: #{residual_block_forward.1} parent=5 // pred_check
      %p265 = pneg %p264
    $region30: #{residual_block_forward.1} parent=5 // pred_check_branch
      %267 = sbr.rel (%p265) target = $region32
    $region31: #{residual_block_forward.1} parent=5 // pred_region
      // Predicated region
      $region33: #{residual_block_forward.1} parent=31 // pred_check
        %p268 = pneg %p47
      $region34: #{residual_block_forward.1} parent=31 // pred_check_branch
        %270 = sbr.rel (%p268) target = $region36
      $region35: #{residual_block_forward.1} parent=31 // pred_region
        %s271 = smul.u32 16, %s21
        %p272 = scmp.lt.s32.totalorder %s20, 1
        %s273 = scalar_select %p272, %s20, 1
        %p274 = scmp.lt.s32.totalorder %s271, 15
        %s275 = scalar_select %p274, %s271, 15
        %s276 = smul.addr %s275, 2
        %s277 = smul.addr %s273, 32
        %s278 = sadd.s32 %s276, %s277
        %s279 = smul.addr %s278, 8
        %s280 = scalar_lea.vmem %s0, %s279
        %s281 = smul.u32 16, %s21
      $region36: #{residual_block_forward.1} parent=31 // pred_fallthru
        _
      // Predicated region
      $region37: #{residual_block_forward.1} parent=31 // pred_check
        %p282 = pneg %p83
      $region38: #{residual_block_forward.1} parent=31 // pred_check_branch
        %284 = sbr.rel (%p282) target = $region40
      $region39: #{residual_block_forward.1} parent=31 // pred_region
        %s285 = smul.u32 %s21, 16
        %s286 = ssub.s32 %s285, 1
        %p287 = scmp.gt.s32.totalorder %s286, 0
        %s288 = scalar_select %p287, %s286, 0
        %p289 = scmp.lt.s32.totalorder %s20, 1
        %s290 = scalar_select %p289, %s20, 1
        %p291 = scmp.lt.s32.totalorder %s288, 15
        %s292 = scalar_select %p291, %s288, 15
        %s293 = smul.addr %s292, 2
        %s294 = smul.addr %s290, 32
        %s295 = sadd.s32 %s293, %s294
        %s296 = smul.addr %s295, 8
        %s297 = scalar_lea.vmem %s1, %s296
        %s298 = smul.u32 %s21, 16
        %s299 = ssub.s32 %s298, 1
        %p300 = scmp.gt.s32.totalorder %s299, 0
        %s301 = scalar_select %p300, %s299, 0
      $region40: #{residual_block_forward.1} parent=31 // pred_fallthru
        _
      // Predicated region
      $region41: #{residual_block_forward.1} parent=31 // pred_check
        %p302 = pneg %p119
      $region42: #{residual_block_forward.1} parent=31 // pred_check_branch
        %304 = sbr.rel (%p302) target = $region44
      $region43: #{residual_block_forward.1} parent=31 // pred_region
        %s305 = sadd.s32 %s21, 1
        %s306 = smul.u32 %s305, 16
        %p307 = scmp.lt.s32.totalorder %s306, 15
        %s308 = scalar_select %p307, %s306, 15
        %p309 = scmp.lt.s32.totalorder %s20, 1
        %s310 = scalar_select %p309, %s20, 1
        %p311 = scmp.lt.s32.totalorder %s308, 15
        %s312 = scalar_select %p311, %s308, 15
        %s313 = smul.addr %s312, 2
        %s314 = smul.addr %s310, 32
        %s315 = sadd.s32 %s313, %s314
        %s316 = smul.addr %s315, 8
        %s317 = scalar_lea.vmem %s2, %s316
        %s318 = sadd.s32 %s21, 1
        %s319 = smul.u32 %s318, 16
        %p320 = scmp.lt.s32.totalorder %s319, 15
        %s321 = scalar_select %p320, %s319, 15
      $region44: #{residual_block_forward.1} parent=31 // pred_fallthru
        _
    $region32: #{residual_block_forward.1} parent=5 // pred_fallthru
      _
    %p322 = scmp.le.s32.totalorder 1, %s13
    %p323 = scmp.lt.s32.totalorder %s13, 3
    %p324 = pnand %p322, %p323
    %p325 = pneg %p324
    // Predicated region
    $region45: #{residual_block_forward.1} parent=5 // pred_check
      _
    $region46: #{residual_block_forward.1} parent=5 // pred_check_branch
      %327 = sbr.rel (%p324) target = $region48
    $region47: #{residual_block_forward.1} parent=5 // pred_region
      %s328 = ssub.s32 %s13, 1
      %s329 = smul.u32 16, %s23
      %p330 = scmp.lt.s32.totalorder %s22, 1
      %s331 = scalar_select %p330, %s22, 1
      %p332 = scmp.lt.s32.totalorder %s329, 15
      %s333 = scalar_select %p332, %s329, 15
      %s334 = smul.addr %s333, 2
      %s335 = smul.addr %s331, 32
      %s336 = sadd.s32 %s334, %s335
      %s337 = smul.addr %s336, 8
      %s338 = scalar_lea.vmem %s0, %s337
      %p339 = pneg %p53
      %p340 = pneg %p50
      %s341 = smul.u32 %s23, 16
      %s342 = ssub.s32 %s341, 1
      %p343 = scmp.gt.s32.totalorder %s342, 0
      %s344 = scalar_select %p343, %s342, 0
      %p345 = scmp.lt.s32.totalorder %s22, 1
      %s346 = scalar_select %p345, %s22, 1
      %p347 = scmp.lt.s32.totalorder %s344, 15
      %s348 = scalar_select %p347, %s344, 15
      %s349 = smul.addr %s348, 2
      %s350 = smul.addr %s346, 32
      %s351 = sadd.s32 %s349, %s350
      %s352 = smul.addr %s351, 8
      %s353 = scalar_lea.vmem %s1, %s352
      %p354 = pneg %p89
      %p355 = pneg %p86
      %s356 = sadd.s32 %s23, 1
      %s357 = smul.u32 %s356, 16
      %p358 = scmp.lt.s32.totalorder %s357, 15
      %s359 = scalar_select %p358, %s357, 15
      %p360 = scmp.lt.s32.totalorder %s22, 1
      %s361 = scalar_select %p360, %s22, 1
      %p362 = scmp.lt.s32.totalorder %s359, 15
      %s363 = scalar_select %p362, %s359, 15
      %s364 = smul.addr %s363, 2
      %s365 = smul.addr %s361, 32
      %s366 = sadd.s32 %s364, %s365
      %s367 = smul.addr %s366, 8
      %s368 = scalar_lea.vmem %s2, %s367
      %p369 = pneg %p125
      %p370 = pneg %p122
      %p371 = pneg %p146
      %p372 = pneg %p143
      %p373 = pneg %p167
      %p374 = pneg %p164
      %p375 = pneg %p188
      %p376 = pneg %p185
      %p377 = pneg %p209
      %p378 = pneg %p206
      %p379 = pneg %p237
      %p380 = pneg %p234
      %s381 = smul.u32 16, %s23
      %p382 = scmp.lt.s32.totalorder %s22, 1
      %s383 = scalar_select %p382, %s22, 1
      %p384 = scmp.lt.s32.totalorder %s381, 15
      %s385 = scalar_select %p384, %s381, 15
      %s386 = smul.addr %s385, 2
      %s387 = smul.addr %s383, 32
      %s388 = sadd.s32 %s386, %s387
      %s389 = smul.addr %s388, 8
      %s390 = scalar_lea.vmem %s7, %s389
      %s391 = smul.u32 16, %s23
      %p392 = scmp.lt.s32.totalorder %s22, 1
      %s393 = scalar_select %p392, %s22, 1
      %p394 = scmp.lt.s32.totalorder %s391, 15
      %s395 = scalar_select %p394, %s391, 15
      %s396 = smul.addr %s395, 2
      %s397 = smul.addr %s393, 32
      %s398 = sadd.s32 %s396, %s397
      %s399 = smul.addr %s398, 8
      %s400 = scalar_lea.vmem %s0, %s399
      %s401 = smul.u32 16, %s23
      %s402 = smul.u32 %s23, 16
      %s403 = ssub.s32 %s402, 1
      %p404 = scmp.gt.s32.totalorder %s403, 0
      %s405 = scalar_select %p404, %s403, 0
      %p406 = scmp.lt.s32.totalorder %s22, 1
      %s407 = scalar_select %p406, %s22, 1
      %p408 = scmp.lt.s32.totalorder %s405, 15
      %s409 = scalar_select %p408, %s405, 15
      %s410 = smul.addr %s409, 2
      %s411 = smul.addr %s407, 32
      %s412 = sadd.s32 %s410, %s411
      %s413 = smul.addr %s412, 8
      %s414 = scalar_lea.vmem %s1, %s413
      %s415 = smul.u32 %s23, 16
      %s416 = ssub.s32 %s415, 1
      %p417 = scmp.gt.s32.totalorder %s416, 0
      %s418 = scalar_select %p417, %s416, 0
      %s419 = sadd.s32 %s23, 1
      %s420 = smul.u32 %s419, 16
      %p421 = scmp.lt.s32.totalorder %s420, 15
      %s422 = scalar_select %p421, %s420, 15
      %p423 = scmp.lt.s32.totalorder %s22, 1
      %s424 = scalar_select %p423, %s22, 1
      %p425 = scmp.lt.s32.totalorder %s422, 15
      %s426 = scalar_select %p425, %s422, 15
      %s427 = smul.addr %s426, 2
      %s428 = smul.addr %s424, 32
      %s429 = sadd.s32 %s427, %s428
      %s430 = smul.addr %s429, 8
      %s431 = scalar_lea.vmem %s2, %s430
      %s432 = sadd.s32 %s23, 1
      %s433 = smul.u32 %s432, 16
      %p434 = scmp.lt.s32.totalorder %s433, 15
      %s435 = scalar_select %p434, %s433, 15
      %s436 = smul.u32 16, %s23
      %p437 = scmp.lt.s32.totalorder %s22, 1
      %s438 = scalar_select %p437, %s22, 1
      %p439 = scmp.lt.s32.totalorder %s436, 15
      %s440 = scalar_select %p439, %s436, 15
      %s441 = smul.addr %s440, 2
      %s442 = smul.addr %s438, 32
      %s443 = sadd.s32 %s441, %s442
      %s444 = smul.addr %s443, 8
      %s445 = scalar_lea.vmem %s7, %s444
      %s446 = smul.u32 16, %s23
      %p448 = scmp.eq.s32.totalorder %s23, 0
      // Predicated region
      $region49: #{residual_block_forward.1} parent=47 // pred_check
        %p449 = pneg %p448
      $region50: #{residual_block_forward.1} parent=47 // pred_check_branch
        %451 = sbr.rel (%p449) target = $region52
      $region51: #{residual_block_forward.1} parent=47 // pred_region
        %vm452 = vcmask 24576
        %vm453 = vsmask.f32 256
        %vm454 = vmand %vm452, %vm453
        %v455 = vld [vmem:[#allocation2] sm:$0x1]
        %v456 = vsel %vm454, 0, %v455
        %457 = vst [vmem:[#allocation2] sm:$0x1] %v456
        %v458 = vld [vmem:[#allocation2 + $0x8] sm:$0x1]
        %v459 = vsel %vm454, 0, %v458
        %460 = vst [vmem:[#allocation2 + $0x8] sm:$0x1] %v459
        %v461 = vld [vmem:[#allocation2 + $0x10] sm:$0x1]
        %v462 = vsel %vm454, 0, %v461
        %463 = vst [vmem:[#allocation2 + $0x10] sm:$0x1] %v462
        %v464 = vld [vmem:[#allocation2 + $0x18] sm:$0x1]
        %v465 = vsel %vm454, 0, %v464
        %466 = vst [vmem:[#allocation2 + $0x18] sm:$0x1] %v465
        %v467 = vld [vmem:[#allocation2 + $0x20] sm:$0x1]
        %v468 = vsel %vm454, 0, %v467
        %469 = vst [vmem:[#allocation2 + $0x20] sm:$0x1] %v468
        %v470 = vld [vmem:[#allocation2 + $0x28] sm:$0x1]
        %v471 = vsel %vm454, 0, %v470
        %472 = vst [vmem:[#allocation2 + $0x28] sm:$0x1] %v471
        %v473 = vld [vmem:[#allocation2 + $0x30] sm:$0x1]
        %v474 = vsel %vm454, 0, %v473
        %475 = vst [vmem:[#allocation2 + $0x30] sm:$0x1] %v474
        %v476 = vld [vmem:[#allocation2 + $0x38] sm:$0x1]
        %v477 = vsel %vm454, 0, %v476
        %478 = vst [vmem:[#allocation2 + $0x38] sm:$0x1] %v477
        %v479 = vld [vmem:[#allocation2 + $0x40] sm:$0x1]
        %v480 = vsel %vm454, 0, %v479
        %481 = vst [vmem:[#allocation2 + $0x40] sm:$0x1] %v480
        %v482 = vld [vmem:[#allocation2 + $0x48] sm:$0x1]
        %v483 = vsel %vm454, 0, %v482
        %484 = vst [vmem:[#allocation2 + $0x48] sm:$0x1] %v483
        %v485 = vld [vmem:[#allocation2 + $0x50] sm:$0x1]
        %v486 = vsel %vm454, 0, %v485
        %487 = vst [vmem:[#allocation2 + $0x50] sm:$0x1] %v486
        %v488 = vld [vmem:[#allocation2 + $0x58] sm:$0x1]
        %v489 = vsel %vm454, 0, %v488
        %490 = vst [vmem:[#allocation2 + $0x58] sm:$0x1] %v489
        %v491 = vld [vmem:[#allocation2 + $0x60] sm:$0x1]
        %v492 = vsel %vm454, 0, %v491
        %493 = vst [vmem:[#allocation2 + $0x60] sm:$0x1] %v492
        %v494 = vld [vmem:[#allocation2 + $0x68] sm:$0x1]
        %v495 = vsel %vm454, 0, %v494
        %496 = vst [vmem:[#allocation2 + $0x68] sm:$0x1] %v495
        %v497 = vld [vmem:[#allocation2 + $0x70] sm:$0x1]
        %v498 = vsel %vm454, 0, %v497
        %499 = vst [vmem:[#allocation2 + $0x70] sm:$0x1] %v498
        %v500 = vld [vmem:[#allocation2 + $0x78] sm:$0x1]
        %v501 = vsel %vm454, 0, %v500
        %502 = vst [vmem:[#allocation2 + $0x78] sm:$0x1] %v501
        %v503 = vld [vmem:[#allocation2 + $0x80] sm:$0x1]
        %v504 = vsel %vm454, 0, %v503
        %505 = vst [vmem:[#allocation2 + $0x80] sm:$0x1] %v504
        %v506 = vld [vmem:[#allocation2 + $0x88] sm:$0x1]
        %v507 = vsel %vm454, 0, %v506
        %508 = vst [vmem:[#allocation2 + $0x88] sm:$0x1] %v507
        %vm509 = vcmask 97351
        %vm510 = vsmask.f32 7966
        %vm511 = vmand %vm509, %vm510
        %v512 = vld [vmem:[#allocation2] sm:$0x80]
        %v513 = vsel %vm511, 0, %v512
        %514 = vst [vmem:[#allocation2] sm:$0x80] %v513
        %v515 = vld [vmem:[#allocation2 + $0x8] sm:$0x80]
        %v516 = vsel %vm511, 0, %v515
        %517 = vst [vmem:[#allocation2 + $0x8] sm:$0x80] %v516
        %v518 = vld [vmem:[#allocation2 + $0x10] sm:$0x80]
        %v519 = vsel %vm511, 0, %v518
        %520 = vst [vmem:[#allocation2 + $0x10] sm:$0x80] %v519
        %v521 = vld [vmem:[#allocation2 + $0x18] sm:$0x80]
        %v522 = vsel %vm511, 0, %v521
        %523 = vst [vmem:[#allocation2 + $0x18] sm:$0x80] %v522
        %v524 = vld [vmem:[#allocation2 + $0x20] sm:$0x80]
        %v525 = vsel %vm511, 0, %v524
        %526 = vst [vmem:[#allocation2 + $0x20] sm:$0x80] %v525
        %v527 = vld [vmem:[#allocation2 + $0x28] sm:$0x80]
        %v528 = vsel %vm511, 0, %v527
        %529 = vst [vmem:[#allocation2 + $0x28] sm:$0x80] %v528
        %v530 = vld [vmem:[#allocation2 + $0x30] sm:$0x80]
        %v531 = vsel %vm511, 0, %v530
        %532 = vst [vmem:[#allocation2 + $0x30] sm:$0x80] %v531
        %v533 = vld [vmem:[#allocation2 + $0x38] sm:$0x80]
        %v534 = vsel %vm511, 0, %v533
        %535 = vst [vmem:[#allocation2 + $0x38] sm:$0x80] %v534
        %v536 = vld [vmem:[#allocation2 + $0x40] sm:$0x80]
        %v537 = vsel %vm511, 0, %v536
        %538 = vst [vmem:[#allocation2 + $0x40] sm:$0x80] %v537
        %v539 = vld [vmem:[#allocation2 + $0x48] sm:$0x80]
        %v540 = vsel %vm511, 0, %v539
        %541 = vst [vmem:[#allocation2 + $0x48] sm:$0x80] %v540
        %v542 = vld [vmem:[#allocation2 + $0x50] sm:$0x80]
        %v543 = vsel %vm511, 0, %v542
        %544 = vst [vmem:[#allocation2 + $0x50] sm:$0x80] %v543
        %v545 = vld [vmem:[#allocation2 + $0x58] sm:$0x80]
        %v546 = vsel %vm511, 0, %v545
        %547 = vst [vmem:[#allocation2 + $0x58] sm:$0x80] %v546
        %v548 = vld [vmem:[#allocation2 + $0x60] sm:$0x80]
        %v549 = vsel %vm511, 0, %v548
        %550 = vst [vmem:[#allocation2 + $0x60] sm:$0x80] %v549
        %v551 = vld [vmem:[#allocation2 + $0x68] sm:$0x80]
        %v552 = vsel %vm511, 0, %v551
        %553 = vst [vmem:[#allocation2 + $0x68] sm:$0x80] %v552
        %v554 = vld [vmem:[#allocation2 + $0x70] sm:$0x80]
        %v555 = vsel %vm511, 0, %v554
        %556 = vst [vmem:[#allocation2 + $0x70] sm:$0x80] %v555
        %v557 = vld [vmem:[#allocation2 + $0x78] sm:$0x80]
        %v558 = vsel %vm511, 0, %v557
        %559 = vst [vmem:[#allocation2 + $0x78] sm:$0x80] %v558
        %v560 = vld [vmem:[#allocation2 + $0x80] sm:$0x80]
        %v561 = vsel %vm511, 0, %v560
        %562 = vst [vmem:[#allocation2 + $0x80] sm:$0x80] %v561
        %v563 = vld [vmem:[#allocation2 + $0x88] sm:$0x80]
        %v564 = vsel %vm511, 0, %v563
        %565 = vst [vmem:[#allocation2 + $0x88] sm:$0x80] %v564
      $region52: #{residual_block_forward.1} parent=47 // pred_fallthru
        _
      %v566 = vld [vmem:[%s400] sm:$0xff]
      %v567 = vld [vmem:[%s400 + $0x8] sm:$0xff]
      %v568 = vld [vmem:[%s400 + $0x10] sm:$0xff]
      %v569 = vld [vmem:[%s400 + $0x18] sm:$0xff]
      %v570 = vld [vmem:[%s400 + $0x20] sm:$0xff]
      %v571 = vld [vmem:[%s400 + $0x28] sm:$0xff]
      %v572 = vld [vmem:[%s400 + $0x30] sm:$0xff]
      %v573 = vld [vmem:[%s400 + $0x38] sm:$0xff]
      %v574 = vld [vmem:[%s400 + $0x40] sm:$0xff]
      %v575 = vld [vmem:[%s400 + $0x48] sm:$0xff]
      %v576 = vld [vmem:[%s400 + $0x50] sm:$0xff]
      %v577 = vld [vmem:[%s400 + $0x58] sm:$0xff]
      %v578 = vld [vmem:[%s400 + $0x60] sm:$0xff]
      %v579 = vld [vmem:[%s400 + $0x68] sm:$0xff]
      %v580 = vld [vmem:[%s400 + $0x70] sm:$0xff]
      %v581 = vld [vmem:[%s400 + $0x78] sm:$0xff]
      %v582 = vld [vmem:[%s400 + $0x80] sm:$0xff]
      %v583 = vld [vmem:[%s400 + $0x88] sm:$0xff]
      %v584 = vld [vmem:[%s400 + $0x90] sm:$0xff]
      %v585 = vld [vmem:[%s400 + $0x98] sm:$0xff]
      %v586 = vld [vmem:[%s400 + $0xa0] sm:$0xff]
      %v587 = vld [vmem:[%s400 + $0xa8] sm:$0xff]
      %v588 = vld [vmem:[%s400 + $0xb0] sm:$0xff]
      %v589 = vld [vmem:[%s400 + $0xb8] sm:$0xff]
      %v590 = vld [vmem:[%s400 + $0xc0] sm:$0xff]
      %v591 = vld [vmem:[%s400 + $0xc8] sm:$0xff]
      %v592 = vld [vmem:[%s400 + $0xd0] sm:$0xff]
      %v593 = vld [vmem:[%s400 + $0xd8] sm:$0xff]
      %v594 = vld [vmem:[%s400 + $0xe0] sm:$0xff]
      %v595 = vld [vmem:[%s400 + $0xe8] sm:$0xff]
      %v596 = vld [vmem:[%s400 + $0xf0] sm:$0xff]
      %v597 = vld [vmem:[%s400 + $0xf8] sm:$0xff]
      %v598 = vmax.f32 %v566, 0.0
      %v599 = vmax.f32 %v567, 0.0
      %v600 = vmax.f32 %v568, 0.0
      %v601 = vmax.f32 %v569, 0.0
      %v602 = vmax.f32 %v570, 0.0
      %v603 = vmax.f32 %v571, 0.0
      %v604 = vmax.f32 %v572, 0.0
      %v605 = vmax.f32 %v573, 0.0
      %v606 = vmax.f32 %v574, 0.0
      %v607 = vmax.f32 %v575, 0.0
      %v608 = vmax.f32 %v576, 0.0
      %v609 = vmax.f32 %v577, 0.0
      %v610 = vmax.f32 %v578, 0.0
      %v611 = vmax.f32 %v579, 0.0
      %v612 = vmax.f32 %v580, 0.0
      %v613 = vmax.f32 %v581, 0.0
      %v614 = vmax.f32 %v582, 0.0
      %v615 = vmax.f32 %v583, 0.0
      %v616 = vmax.f32 %v584, 0.0
      %v617 = vmax.f32 %v585, 0.0
      %v618 = vmax.f32 %v586, 0.0
      %v619 = vmax.f32 %v587, 0.0
      %v620 = vmax.f32 %v588, 0.0
      %v621 = vmax.f32 %v589, 0.0
      %v622 = vmax.f32 %v590, 0.0
      %v623 = vmax.f32 %v591, 0.0
      %v624 = vmax.f32 %v592, 0.0
      %v625 = vmax.f32 %v593, 0.0
      %v626 = vmax.f32 %v594, 0.0
      %v627 = vmax.f32 %v595, 0.0
      %v628 = vmax.f32 %v596, 0.0
      %v629 = vmax.f32 %v597, 0.0
      %v630 = vpack.c.bf16 %v599, %v598
      %v631 = vpack.c.bf16 %v601, %v600
      %v632 = vpack.c.bf16 %v603, %v602
      %v633 = vpack.c.bf16 %v605, %v604
      %v634 = vpack.c.bf16 %v607, %v606
      %v635 = vpack.c.bf16 %v609, %v608
      %v636 = vpack.c.bf16 %v611, %v610
      %v637 = vpack.c.bf16 %v613, %v612
      %v638 = vpack.c.bf16 %v615, %v614
      %v639 = vpack.c.bf16 %v617, %v616
      %v640 = vpack.c.bf16 %v619, %v618
      %v641 = vpack.c.bf16 %v621, %v620
      %v642 = vpack.c.bf16 %v623, %v622
      %v643 = vpack.c.bf16 %v625, %v624
      %v644 = vpack.c.bf16 %v627, %v626
      %v645 = vpack.c.bf16 %v629, %v628
      %662 = vrot.lane.b32.xlu0 %v630, 4
      %v663 = vpop.permute.xlu0 %662
      %664 = vrot.lane.b32.xlu0 %v631, 4
      %v665 = vpop.permute.xlu0 %664
      %666 = vrot.lane.b32.xlu0 %v632, 4
      %v667 = vpop.permute.xlu0 %666
      %668 = vrot.lane.b32.xlu0 %v633, 4
      %v669 = vpop.permute.xlu0 %668
      %670 = vrot.lane.b32.xlu0 %v634, 4
      %v671 = vpop.permute.xlu0 %670
      %672 = vrot.lane.b32.xlu0 %v635, 4
      %v673 = vpop.permute.xlu0 %672
      %674 = vrot.lane.b32.xlu0 %v636, 4
      %v675 = vpop.permute.xlu0 %674
      %676 = vrot.lane.b32.xlu0 %v637, 4
      %v677 = vpop.permute.xlu0 %676
      %678 = vrot.lane.b32.xlu0 %v638, 4
      %v679 = vpop.permute.xlu0 %678
      %680 = vrot.lane.b32.xlu0 %v639, 4
      %v681 = vpop.permute.xlu0 %680
      %682 = vrot.lane.b32.xlu0 %v640, 4
      %v683 = vpop.permute.xlu0 %682
      %684 = vrot.lane.b32.xlu0 %v641, 4
      %v685 = vpop.permute.xlu0 %684
      %686 = vrot.lane.b32.xlu0 %v642, 4
      %v687 = vpop.permute.xlu0 %686
      %688 = vrot.lane.b32.xlu0 %v643, 4
      %v689 = vpop.permute.xlu0 %688
      %690 = vrot.lane.b32.xlu0 %v644, 4
      %v691 = vpop.permute.xlu0 %690
      %692 = vrot.lane.b32.xlu0 %v645, 4
      %v693 = vpop.permute.xlu0 %692
      %s710 = scalar_lea.vmem [#allocation2], 8
      %vm711 = vcmask 64544
      %712 = vst.msk [vmem:[%s710] sm:$0xff] %vm711, %v663
      %713 = vst.msk [vmem:[%s710 + $0x8] sm:$0xff] %vm711, %v665
      %714 = vst.msk [vmem:[%s710 + $0x10] sm:$0xff] %vm711, %v667
      %715 = vst.msk [vmem:[%s710 + $0x18] sm:$0xff] %vm711, %v669
      %716 = vst.msk [vmem:[%s710 + $0x20] sm:$0xff] %vm711, %v671
      %717 = vst.msk [vmem:[%s710 + $0x28] sm:$0xff] %vm711, %v673
      %718 = vst.msk [vmem:[%s710 + $0x30] sm:$0xff] %vm711, %v675
      %719 = vst.msk [vmem:[%s710 + $0x38] sm:$0xff] %vm711, %v677
      %720 = vst.msk [vmem:[%s710 + $0x40] sm:$0xff] %vm711, %v679
      %721 = vst.msk [vmem:[%s710 + $0x48] sm:$0xff] %vm711, %v681
      %722 = vst.msk [vmem:[%s710 + $0x50] sm:$0xff] %vm711, %v683
      %723 = vst.msk [vmem:[%s710 + $0x58] sm:$0xff] %vm711, %v685
      %724 = vst.msk [vmem:[%s710 + $0x60] sm:$0xff] %vm711, %v687
      %725 = vst.msk [vmem:[%s710 + $0x68] sm:$0xff] %vm711, %v689
      %726 = vst.msk [vmem:[%s710 + $0x70] sm:$0xff] %vm711, %v691
      %727 = vst.msk [vmem:[%s710 + $0x78] sm:$0xff] %vm711, %v693
      %v729 = vshrl.u32 %v630, 16
      %v731 = vrot.slane %v729, 7
      %v732 = vshll.u32 %v630, 16
      %v734 = vor.u32 %v731, %v732
      %v736 = vshrl.u32 %v631, 16
      %v738 = vrot.slane %v736, 7
      %v739 = vshll.u32 %v631, 16
      %v741 = vor.u32 %v738, %v739
      %v743 = vshrl.u32 %v632, 16
      %v745 = vrot.slane %v743, 7
      %v746 = vshll.u32 %v632, 16
      %v748 = vor.u32 %v745, %v746
      %v750 = vshrl.u32 %v633, 16
      %v752 = vrot.slane %v750, 7
      %v753 = vshll.u32 %v633, 16
      %v755 = vor.u32 %v752, %v753
      %v757 = vshrl.u32 %v634, 16
      %v759 = vrot.slane %v757, 7
      %v760 = vshll.u32 %v634, 16
      %v762 = vor.u32 %v759, %v760
      %v764 = vshrl.u32 %v635, 16
      %v766 = vrot.slane %v764, 7
      %v767 = vshll.u32 %v635, 16
      %v769 = vor.u32 %v766, %v767
      %v771 = vshrl.u32 %v636, 16
      %v773 = vrot.slane %v771, 7
      %v774 = vshll.u32 %v636, 16
      %v776 = vor.u32 %v773, %v774
      %v778 = vshrl.u32 %v637, 16
      %v780 = vrot.slane %v778, 7
      %v781 = vshll.u32 %v637, 16
      %v783 = vor.u32 %v780, %v781
      %v785 = vshrl.u32 %v638, 16
      %v787 = vrot.slane %v785, 7
      %v788 = vshll.u32 %v638, 16
      %v790 = vor.u32 %v787, %v788
      %v792 = vshrl.u32 %v639, 16
      %v794 = vrot.slane %v792, 7
      %v795 = vshll.u32 %v639, 16
      %v797 = vor.u32 %v794, %v795
      %v799 = vshrl.u32 %v640, 16
      %v801 = vrot.slane %v799, 7
      %v802 = vshll.u32 %v640, 16
      %v804 = vor.u32 %v801, %v802
      %v806 = vshrl.u32 %v641, 16
      %v808 = vrot.slane %v806, 7
      %v809 = vshll.u32 %v641, 16
      %v811 = vor.u32 %v808, %v809
      %v813 = vshrl.u32 %v642, 16
      %v815 = vrot.slane %v813, 7
      %v816 = vshll.u32 %v642, 16
      %v818 = vor.u32 %v815, %v816
      %v820 = vshrl.u32 %v643, 16
      %v822 = vrot.slane %v820, 7
      %v823 = vshll.u32 %v643, 16
      %v825 = vor.u32 %v822, %v823
      %v827 = vshrl.u32 %v644, 16
      %v829 = vrot.slane %v827, 7
      %v830 = vshll.u32 %v644, 16
      %v832 = vor.u32 %v829, %v830
      %v834 = vshrl.u32 %v645, 16
      %v836 = vrot.slane %v834, 7
      %v837 = vshll.u32 %v645, 16
      %v839 = vor.u32 %v836, %v837
      %vm856 = vcmask 31744
      %vm857 = vsmask.f32 7938
      %vm858 = vmand %vm856, %vm857
      %v859 = vld [vmem:[%s710] sm:$0xff]
      %v860 = vsel %vm858, %v734, %v859
      %861 = vst [vmem:[%s710] sm:$0xff] %v860
      %v862 = vld [vmem:[%s710 + $0x8] sm:$0xff]
      %v863 = vsel %vm858, %v741, %v862
      %864 = vst [vmem:[%s710 + $0x8] sm:$0xff] %v863
      %v865 = vld [vmem:[%s710 + $0x10] sm:$0xff]
      %v866 = vsel %vm858, %v748, %v865
      %867 = vst [vmem:[%s710 + $0x10] sm:$0xff] %v866
      %v868 = vld [vmem:[%s710 + $0x18] sm:$0xff]
      %v869 = vsel %vm858, %v755, %v868
      %870 = vst [vmem:[%s710 + $0x18] sm:$0xff] %v869
      %v871 = vld [vmem:[%s710 + $0x20] sm:$0xff]
      %v872 = vsel %vm858, %v762, %v871
      %873 = vst [vmem:[%s710 + $0x20] sm:$0xff] %v872
      %v874 = vld [vmem:[%s710 + $0x28] sm:$0xff]
      %v875 = vsel %vm858, %v769, %v874
      %876 = vst [vmem:[%s710 + $0x28] sm:$0xff] %v875
      %v877 = vld [vmem:[%s710 + $0x30] sm:$0xff]
      %v878 = vsel %vm858, %v776, %v877
      %879 = vst [vmem:[%s710 + $0x30] sm:$0xff] %v878
      %v880 = vld [vmem:[%s710 + $0x38] sm:$0xff]
      %v881 = vsel %vm858, %v783, %v880
      %882 = vst [vmem:[%s710 + $0x38] sm:$0xff] %v881
      %v883 = vld [vmem:[%s710 + $0x40] sm:$0xff]
      %v884 = vsel %vm858, %v790, %v883
      %885 = vst [vmem:[%s710 + $0x40] sm:$0xff] %v884
      %v886 = vld [vmem:[%s710 + $0x48] sm:$0xff]
      %v887 = vsel %vm858, %v797, %v886
      %888 = vst [vmem:[%s710 + $0x48] sm:$0xff] %v887
      %v889 = vld [vmem:[%s710 + $0x50] sm:$0xff]
      %v890 = vsel %vm858, %v804, %v889
      %891 = vst [vmem:[%s710 + $0x50] sm:$0xff] %v890
      %v892 = vld [vmem:[%s710 + $0x58] sm:$0xff]
      %v893 = vsel %vm858, %v811, %v892
      %894 = vst [vmem:[%s710 + $0x58] sm:$0xff] %v893
      %v895 = vld [vmem:[%s710 + $0x60] sm:$0xff]
      %v896 = vsel %vm858, %v818, %v895
      %897 = vst [vmem:[%s710 + $0x60] sm:$0xff] %v896
      %v898 = vld [vmem:[%s710 + $0x68] sm:$0xff]
      %v899 = vsel %vm858, %v825, %v898
      %900 = vst [vmem:[%s710 + $0x68] sm:$0xff] %v899
      %v901 = vld [vmem:[%s710 + $0x70] sm:$0xff]
      %v902 = vsel %vm858, %v832, %v901
      %903 = vst [vmem:[%s710 + $0x70] sm:$0xff] %v902
      %v904 = vld [vmem:[%s710 + $0x78] sm:$0xff]
      %v905 = vsel %vm858, %v839, %v904
      %906 = vst [vmem:[%s710 + $0x78] sm:$0xff] %v905
      %v907 = vrot.slane %v732, 1
      %v908 = vor.u32 %v729, %v907
      %v909 = vrot.slane %v739, 1
      %v910 = vor.u32 %v736, %v909
      %v911 = vrot.slane %v746, 1
      %v912 = vor.u32 %v743, %v911
      %v913 = vrot.slane %v753, 1
      %v914 = vor.u32 %v750, %v913
      %v915 = vrot.slane %v760, 1
      %v916 = vor.u32 %v757, %v915
      %v917 = vrot.slane %v767, 1
      %v918 = vor.u32 %v764, %v917
      %v919 = vrot.slane %v774, 1
      %v920 = vor.u32 %v771, %v919
      %v921 = vrot.slane %v781, 1
      %v922 = vor.u32 %v778, %v921
      %v923 = vrot.slane %v788, 1
      %v924 = vor.u32 %v785, %v923
      %v925 = vrot.slane %v795, 1
      %v926 = vor.u32 %v792, %v925
      %v927 = vrot.slane %v802, 1
      %v928 = vor.u32 %v799, %v927
      %v929 = vrot.slane %v809, 1
      %v930 = vor.u32 %v806, %v929
      %v931 = vrot.slane %v816, 1
      %v932 = vor.u32 %v813, %v931
      %v933 = vrot.slane %v823, 1
      %v934 = vor.u32 %v820, %v933
      %v935 = vrot.slane %v830, 1
      %v936 = vor.u32 %v827, %v935
      %v937 = vrot.slane %v837, 1
      %v938 = vor.u32 %v834, %v937
      %939 = vrot.lane.b32.xlu0 %v908, 8
      %v940 = vpop.permute.xlu0 %939
      %941 = vrot.lane.b32.xlu0 %v910, 8
      %v942 = vpop.permute.xlu0 %941
      %943 = vrot.lane.b32.xlu0 %v912, 8
      %v944 = vpop.permute.xlu0 %943
      %945 = vrot.lane.b32.xlu0 %v914, 8
      %v946 = vpop.permute.xlu0 %945
      %947 = vrot.lane.b32.xlu0 %v916, 8
      %v948 = vpop.permute.xlu0 %947
      %949 = vrot.lane.b32.xlu0 %v918, 8
      %v950 = vpop.permute.xlu0 %949
      %951 = vrot.lane.b32.xlu0 %v920, 8
      %v952 = vpop.permute.xlu0 %951
      %953 = vrot.lane.b32.xlu0 %v922, 8
      %v954 = vpop.permute.xlu0 %953
      %955 = vrot.lane.b32.xlu0 %v924, 8
      %v956 = vpop.permute.xlu0 %955
      %957 = vrot.lane.b32.xlu0 %v926, 8
      %v958 = vpop.permute.xlu0 %957
      %959 = vrot.lane.b32.xlu0 %v928, 8
      %v960 = vpop.permute.xlu0 %959
      %961 = vrot.lane.b32.xlu0 %v930, 8
      %v962 = vpop.permute.xlu0 %961
      %963 = vrot.lane.b32.xlu0 %v932, 8
      %v964 = vpop.permute.xlu0 %963
      %965 = vrot.lane.b32.xlu0 %v934, 8
      %v966 = vpop.permute.xlu0 %965
      %967 = vrot.lane.b32.xlu0 %v936, 8
      %v968 = vpop.permute.xlu0 %967
      %969 = vrot.lane.b32.xlu0 %v938, 8
      %v970 = vpop.permute.xlu0 %969
      %vm987 = vcmask 97344
      %vm988 = vsmask.f32 7424
      %vm989 = vmand %vm987, %vm988
      %v990 = vld [vmem:[%s710] sm:$0xff]
      %v991 = vsel %vm989, %v940, %v990
      %992 = vst [vmem:[%s710] sm:$0xff] %v991
      %v993 = vld [vmem:[%s710 + $0x8] sm:$0xff]
      %v994 = vsel %vm989, %v942, %v993
      %995 = vst [vmem:[%s710 + $0x8] sm:$0xff] %v994
      %v996 = vld [vmem:[%s710 + $0x10] sm:$0xff]
      %v997 = vsel %vm989, %v944, %v996
      %998 = vst [vmem:[%s710 + $0x10] sm:$0xff] %v997
      %v999 = vld [vmem:[%s710 + $0x18] sm:$0xff]
      %v1000 = vsel %vm989, %v946, %v999
      %1001 = vst [vmem:[%s710 + $0x18] sm:$0xff] %v1000
      %v1002 = vld [vmem:[%s710 + $0x20] sm:$0xff]
      %v1003 = vsel %vm989, %v948, %v1002
      %1004 = vst [vmem:[%s710 + $0x20] sm:$0xff] %v1003
      %v1005 = vld [vmem:[%s710 + $0x28] sm:$0xff]
      %v1006 = vsel %vm989, %v950, %v1005
      %1007 = vst [vmem:[%s710 + $0x28] sm:$0xff] %v1006
      %v1008 = vld [vmem:[%s710 + $0x30] sm:$0xff]
      %v1009 = vsel %vm989, %v952, %v1008
      %1010 = vst [vmem:[%s710 + $0x30] sm:$0xff] %v1009
      %v1011 = vld [vmem:[%s710 + $0x38] sm:$0xff]
      %v1012 = vsel %vm989, %v954, %v1011
      %1013 = vst [vmem:[%s710 + $0x38] sm:$0xff] %v1012
      %v1014 = vld [vmem:[%s710 + $0x40] sm:$0xff]
      %v1015 = vsel %vm989, %v956, %v1014
      %1016 = vst [vmem:[%s710 + $0x40] sm:$0xff] %v1015
      %v1017 = vld [vmem:[%s710 + $0x48] sm:$0xff]
      %v1018 = vsel %vm989, %v958, %v1017
      %1019 = vst [vmem:[%s710 + $0x48] sm:$0xff] %v1018
      %v1020 = vld [vmem:[%s710 + $0x50] sm:$0xff]
      %v1021 = vsel %vm989, %v960, %v1020
      %1022 = vst [vmem:[%s710 + $0x50] sm:$0xff] %v1021
      %v1023 = vld [vmem:[%s710 + $0x58] sm:$0xff]
      %v1024 = vsel %vm989, %v962, %v1023
      %1025 = vst [vmem:[%s710 + $0x58] sm:$0xff] %v1024
      %v1026 = vld [vmem:[%s710 + $0x60] sm:$0xff]
      %v1027 = vsel %vm989, %v964, %v1026
      %1028 = vst [vmem:[%s710 + $0x60] sm:$0xff] %v1027
      %v1029 = vld [vmem:[%s710 + $0x68] sm:$0xff]
      %v1030 = vsel %vm989, %v966, %v1029
      %1031 = vst [vmem:[%s710 + $0x68] sm:$0xff] %v1030
      %v1032 = vld [vmem:[%s710 + $0x70] sm:$0xff]
      %v1033 = vsel %vm989, %v968, %v1032
      %1034 = vst [vmem:[%s710 + $0x70] sm:$0xff] %v1033
      %v1035 = vld [vmem:[%s710 + $0x78] sm:$0xff]
      %v1036 = vsel %vm989, %v970, %v1035
      %1037 = vst [vmem:[%s710 + $0x78] sm:$0xff] %v1036
      // Predicated region
      $region53: #{residual_block_forward.1} parent=47 // pred_check
        %p1038 = pneg %p448
      $region54: #{residual_block_forward.1} parent=47 // pred_check_branch
        %1040 = sbr.rel (%p1038) target = $region56
      $region55: #{residual_block_forward.1} parent=47 // pred_region
        %vm1041 = vcmask 97280
        %1042 = vst.msk [vmem:[#allocation2] sm:$0xff] %vm1041, 0
      $region56: #{residual_block_forward.1} parent=47 // pred_fallthru
        _
      %p1043 = scmp.gt.s32.totalorder %s23, 0
      // Predicated region
      $region57: #{residual_block_forward.1} parent=47 // pred_check
        %p1044 = pneg %p1043
      $region58: #{residual_block_forward.1} parent=47 // pred_check_branch
        %1046 = sbr.rel (%p1044) target = $region60
      $region59: #{residual_block_forward.1} parent=47 // pred_region
        %v1047 = vld [vmem:[%s414] sm:$0xff]
        %v1048 = vld [vmem:[%s414 + $0x8] sm:$0xff]
        %v1049 = vmax.f32 %v1047, 0.0
        %v1050 = vmax.f32 %v1048, 0.0
        %v1051 = vpack.c.bf16 %v1050, %v1049
        %1053 = vrot.lane.b32.xlu0 %v1051, 4
        %v1054 = vpop.permute.xlu0 %1053
        %1056 = vst.msk [vmem:[#allocation2] sm:$0xff] %vm711, %v1054
        %v1058 = vshrl.u32 %v1051, 16
        %v1060 = vrot.slane %v1058, 7
        %v1061 = vshll.u32 %v1051, 16
        %v1063 = vor.u32 %v1060, %v1061
        %v1065 = vld [vmem:[#allocation2] sm:$0xff]
        %v1066 = vsel %vm858, %v1063, %v1065
        %1067 = vst [vmem:[#allocation2] sm:$0xff] %v1066
        %v1068 = vrot.slane %v1061, 1
        %v1069 = vor.u32 %v1058, %v1068
        %1070 = vrot.lane.b32.xlu0 %v1069, 8
        %v1071 = vpop.permute.xlu0 %1070
        %v1073 = vld [vmem:[#allocation2] sm:$0xff]
        %v1074 = vsel %vm989, %v1071, %v1073
        %1075 = vst [vmem:[#allocation2] sm:$0xff] %v1074
      $region60: #{residual_block_forward.1} parent=47 // pred_fallthru
        _
      // Predicated region
      $region61: #{residual_block_forward.1} parent=47 // pred_check
        %p1076 = pneg %p448
      $region62: #{residual_block_forward.1} parent=47 // pred_check_branch
        %1078 = sbr.rel (%p1076) target = $region64
      $region63: #{residual_block_forward.1} parent=47 // pred_region
        %s1079 = scalar_lea.vmem [#allocation2], 136
        %vm1080 = vcmask 97280
        %1081 = vst.msk [vmem:[%s1079] sm:$0xff] %vm1080, 0
      $region64: #{residual_block_forward.1} parent=47 // pred_fallthru
        _
      %p1082 = scmp.lt.s32.totalorder %s23, 0
      // Predicated region
      $region65: #{residual_block_forward.1} parent=47 // pred_check
        %p1083 = pneg %p1082
      $region66: #{residual_block_forward.1} parent=47 // pred_check_branch
        %1085 = sbr.rel (%p1083) target = $region68
      $region67: #{residual_block_forward.1} parent=47 // pred_region
        %v1086 = vld [vmem:[%s431] sm:$0xff]
        %v1087 = vld [vmem:[%s431 + $0x8] sm:$0xff]
        %v1088 = vmax.f32 %v1086, 0.0
        %v1089 = vmax.f32 %v1087, 0.0
        %v1090 = vpack.c.bf16 %v1089, %v1088
        %1092 = vrot.lane.b32.xlu0 %v1090, 4
        %v1093 = vpop.permute.xlu0 %1092
        %s1095 = scalar_lea.vmem [#allocation2], 136
        %1096 = vst.msk [vmem:[%s1095] sm:$0xff] %vm711, %v1093
        %v1098 = vshrl.u32 %v1090, 16
        %v1100 = vrot.slane %v1098, 7
        %v1101 = vshll.u32 %v1090, 16
        %v1103 = vor.u32 %v1100, %v1101
        %v1105 = vld [vmem:[%s1095] sm:$0xff]
        %v1106 = vsel %vm858, %v1103, %v1105
        %1107 = vst [vmem:[%s1095] sm:$0xff] %v1106
        %v1108 = vrot.slane %v1101, 1
        %v1109 = vor.u32 %v1098, %v1108
        %1110 = vrot.lane.b32.xlu0 %v1109, 8
        %v1111 = vpop.permute.xlu0 %1110
        %v1113 = vld [vmem:[%s1095] sm:$0xff]
        %v1114 = vsel %vm989, %v1111, %v1113
        %1115 = vst [vmem:[%s1095] sm:$0xff] %v1114
      $region68: #{residual_block_forward.1} parent=47 // pred_fallthru
        _
      %v1116 = vld [vmem:[%s3] sm:$0xf]
      %v1117 = vld [vmem:[%s3 + $0x4] sm:$0x3]
      %v1118 = vld [vmem:[%s3 + $0x8] sm:$0xf]
      %v1119 = vld [vmem:[%s3 + $0xc] sm:$0x3]
      %v1120 = vld [vmem:[%s3 + $0x10] sm:$0xf]
      %v1121 = vld [vmem:[%s3 + $0x14] sm:$0x3]
      %v1122 = vld [vmem:[#allocation2] sm:$0xff]
      %v1123 = vld [vmem:[#allocation2 + $0x8] sm:$0xff]
      %v1124 = vld [vmem:[#allocation2 + $0x10] sm:$0xff]
      %v1125 = vld [vmem:[#allocation2 + $0x18] sm:$0xff]
      %v1126 = vld [vmem:[#allocation2 + $0x20] sm:$0xff]
      %v1127 = vld [vmem:[#allocation2 + $0x28] sm:$0xff]
      %v1128 = vld [vmem:[#allocation2 + $0x30] sm:$0xff]
      %v1129 = vld [vmem:[#allocation2 + $0x38] sm:$0xff]
      %v1130 = vld [vmem:[#allocation2 + $0x40] sm:$0xff]
      %v1131 = vld [vmem:[#allocation2 + $0x48] sm:$0xff]
      %v1132 = vld [vmem:[#allocation2 + $0x50] sm:$0xff]
      %v1133 = vld [vmem:[#allocation2 + $0x58] sm:$0xff]
      %v1134 = vld [vmem:[#allocation2 + $0x60] sm:$0xff]
      %v1135 = vld [vmem:[#allocation2 + $0x68] sm:$0xff]
      %v1136 = vld [vmem:[#allocation2 + $0x70] sm:$0xff]
      %v1137 = vld [vmem:[#allocation2 + $0x78] sm:$0xff]
      %v1138 = vld [vmem:[%s4] sm:$0x1]
      %v1140 = vlaneseq
      %v1141 = vshrl.u32 %v1140, 7
      %v1142 = vsub.s32 0, %v1141
      %v1143 = vrot.slane %v1138, %v1142
      %v1147 = vunpack.c.l.b16 %v1116
      %v1148 = vunpack.c.l.b16 %v1117
      %v1149 = vpack.c.b16 %v1148, %v1147
      %vm1150 = vcmask 97280
      %v1152 = vsel %vm1150, %v1122, 0
      %v1155 = vsel %vm1150, %v1123, 0
      %v1158 = vsel %vm1150, %v1124, 0
      %v1161 = vsel %vm1150, %v1125, 0
      %v1164 = vsel %vm1150, %v1126, 0
      %v1167 = vsel %vm1150, %v1127, 0
      %v1170 = vsel %vm1150, %v1128, 0
      %v1173 = vsel %vm1150, %v1129, 0
      %v1176 = vsel %vm1150, %v1130, 0
      %v1179 = vsel %vm1150, %v1131, 0
      %v1182 = vsel %vm1150, %v1132, 0
      %v1185 = vsel %vm1150, %v1133, 0
      %v1188 = vsel %vm1150, %v1134, 0
      %v1191 = vsel %vm1150, %v1135, 0
      %v1194 = vsel %vm1150, %v1136, 0
      %v1197 = vsel %vm1150, %v1137, 0
      %vm1199 = vcmask 1045504
      %v1201 = vsel %vm1199, %v1149, 0
      %1203 = vmatprep.subr.bf16.mxu0 0
      %1204 = vmatpush1.bf16.msra.mxu0 %v1201
      %1205 = vmatprep.subr.bf16.mxu0 0
      %1206 = vmatpush1.bf16.msra.mxu0 0
      %1207 = vmatprep.subr.bf16.mxu0 0
      %1208 = vmatpush1.bf16.msra.mxu0 0
      %1209 = vmatprep.subr.bf16.mxu0 0
      %1210 = vmatpush1.bf16.msra.mxu0 0
      %1211 = vmatprep.subr.bf16.mxu0 0
      %1212 = vmatpush1.bf16.msra.mxu0 0
      %1213 = vmatprep.subr.bf16.mxu0 0
      %1214 = vmatpush1.bf16.msra.mxu0 0
      %1215 = vmatprep.subr.bf16.mxu0 0
      %1216 = vmatpush1.bf16.msra.mxu0 0
      %1217 = vmatprep.subr.bf16.mxu0 0
      %1218 = vmatpush1.bf16.msra.mxu0 0
      %1219 = vmatprep.subr.bf16.mxu0 0
      %1220 = vmatpush1.bf16.msra.mxu0 0
      %1221 = vmatprep.subr.bf16.mxu0 0
      %1222 = vmatpush1.bf16.msra.mxu0 0
      %1223 = vmatprep.subr.bf16.mxu0 0
      %1224 = vmatpush1.bf16.msra.mxu0 0
      %1225 = vmatprep.subr.bf16.mxu0 0
      %1226 = vmatpush1.bf16.msra.mxu0 0
      %1227 = vmatprep.subr.bf16.mxu0 0
      %1228 = vmatpush1.bf16.msra.mxu0 0
      %1229 = vmatprep.subr.bf16.mxu0 0
      %1230 = vmatpush1.bf16.msra.mxu0 0
      %1231 = vmatprep.subr.bf16.mxu0 0
      %1232 = vmatpush1.bf16.msra.mxu0 0
      %1233 = vmatprep.subr.bf16.mxu0 0
      %1234 = vmatpush1.bf16.msra.mxu0 0
      %1235 = vmatprep.mubr.bf16.mxu0 0
      %1236 = vmatmul.mubr.bf16.gmra.mrb[0].mxu0 %v1152
      %v1237 = vpop.f32.mrb[0].mxu0
      %v1238 = vadd.f32 %v1143, %v1237
      %v1239 = vpop.f32.mrb[0].mxu0
      %v1240 = vpop.f32.mrb[0].mxu0
      %v1241 = vadd.f32 %v1143, %v1240
      %v1242 = vpop.f32.mrb[0].mxu0
      %1243 = vmatprep.mubr.bf16.mxu0 0
      %1244 = vmatmul.mubr.bf16.gmra.mrb[0].mxu0 %v1155
      %v1245 = vpop.f32.mrb[0].mxu0
      %v1246 = vadd.f32 %v1143, %v1245
      %v1247 = vpop.f32.mrb[0].mxu0
      %v1248 = vpop.f32.mrb[0].mxu0
      %v1249 = vadd.f32 %v1143, %v1248
      %v1250 = vpop.f32.mrb[0].mxu0
      %1251 = vmatprep.mubr.bf16.mxu0 0
      %1252 = vmatmul.mubr.bf16.gmra.mrb[0].mxu0 %v1158
      %v1253 = vpop.f32.mrb[0].mxu0
      %v1254 = vadd.f32 %v1143, %v1253
      %v1255 = vpop.f32.mrb[0].mxu0
      %v1256 = vpop.f32.mrb[0].mxu0
      %v1257 = vadd.f32 %v1143, %v1256
      %v1258 = vpop.f32.mrb[0].mxu0
      %1259 = vmatprep.mubr.bf16.mxu0 0
      %1260 = vmatmul.mubr.bf16.gmra.mrb[0].mxu0 %v1161
      %v1261 = vpop.f32.mrb[0].mxu0
      %v1262 = vadd.f32 %v1143, %v1261
      %v1263 = vpop.f32.mrb[0].mxu0
      %v1264 = vpop.f32.mrb[0].mxu0
      %v1265 = vadd.f32 %v1143, %v1264
      %v1266 = vpop.f32.mrb[0].mxu0
      %1267 = vmatprep.mubr.bf16.mxu0 0
      %1268 = vmatmul.mubr.bf16.gmra.mrb[0].mxu0 %v1164
      %v1269 = vpop.f32.mrb[0].mxu0
      %v1270 = vadd.f32 %v1143, %v1269
      %v1271 = vpop.f32.mrb[0].mxu0
      %v1272 = vpop.f32.mrb[0].mxu0
      %v1273 = vadd.f32 %v1143, %v1272
      %v1274 = vpop.f32.mrb[0].mxu0
      %1275 = vmatprep.mubr.bf16.mxu0 0
      %1276 = vmatmul.mubr.bf16.gmra.mrb[0].mxu0 %v1167
      %v1277 = vpop.f32.mrb[0].mxu0
      %v1278 = vadd.f32 %v1143, %v1277
      %v1279 = vpop.f32.mrb[0].mxu0
      %v1280 = vpop.f32.mrb[0].mxu0
      %v1281 = vadd.f32 %v1143, %v1280
      %v1282 = vpop.f32.mrb[0].mxu0
      %1283 = vmatprep.mubr.bf16.mxu0 0
      %1284 = vmatmul.mubr.bf16.gmra.mrb[0].mxu0 %v1170
      %v1285 = vpop.f32.mrb[0].mxu0
      %v1286 = vadd.f32 %v1143, %v1285
      %v1287 = vpop.f32.mrb[0].mxu0
      %v1288 = vpop.f32.mrb[0].mxu0
      %v1289 = vadd.f32 %v1143, %v1288
      %v1290 = vpop.f32.mrb[0].mxu0
      %1291 = vmatprep.mubr.bf16.mxu0 0
      %1292 = vmatmul.mubr.bf16.gmra.mrb[0].mxu0 %v1173
      %v1293 = vpop.f32.mrb[0].mxu0
      %v1294 = vadd.f32 %v1143, %v1293
      %v1295 = vpop.f32.mrb[0].mxu0
      %v1296 = vpop.f32.mrb[0].mxu0
      %v1297 = vadd.f32 %v1143, %v1296
      %v1298 = vpop.f32.mrb[0].mxu0
      %1299 = vmatprep.mubr.bf16.mxu0 0
      %1300 = vmatmul.mubr.bf16.gmra.mrb[0].mxu0 %v1176
      %v1301 = vpop.f32.mrb[0].mxu0
      %v1302 = vadd.f32 %v1143, %v1301
      %v1303 = vpop.f32.mrb[0].mxu0
      %v1304 = vpop.f32.mrb[0].mxu0
      %v1305 = vadd.f32 %v1143, %v1304
      %v1306 = vpop.f32.mrb[0].mxu0
      %1307 = vmatprep.mubr.bf16.mxu0 0
      %1308 = vmatmul.mubr.bf16.gmra.mrb[0].mxu0 %v1179
      %v1309 = vpop.f32.mrb[0].mxu0
      %v1310 = vadd.f32 %v1143, %v1309
      %v1311 = vpop.f32.mrb[0].mxu0
      %v1312 = vpop.f32.mrb[0].mxu0
      %v1313 = vadd.f32 %v1143, %v1312
      %v1314 = vpop.f32.mrb[0].mxu0
      %1315 = vmatprep.mubr.bf16.mxu0 0
      %1316 = vmatmul.mubr.bf16.gmra.mrb[0].mxu0 %v1182
      %v1317 = vpop.f32.mrb[0].mxu0
      %v1318 = vadd.f32 %v1143, %v1317
      %v1319 = vpop.f32.mrb[0].mxu0
      %v1320 = vpop.f32.mrb[0].mxu0
      %v1321 = vadd.f32 %v1143, %v1320
      %v1322 = vpop.f32.mrb[0].mxu0
      %1323 = vmatprep.mubr.bf16.mxu0 0
      %1324 = vmatmul.mubr.bf16.gmra.mrb[0].mxu0 %v1185
      %v1325 = vpop.f32.mrb[0].mxu0
      %v1326 = vadd.f32 %v1143, %v1325
      %v1327 = vpop.f32.mrb[0].mxu0
      %v1328 = vpop.f32.mrb[0].mxu0
      %v1329 = vadd.f32 %v1143, %v1328
      %v1330 = vpop.f32.mrb[0].mxu0
      %1331 = vmatprep.mubr.bf16.mxu0 0
      %1332 = vmatmul.mubr.bf16.gmra.mrb[0].mxu0 %v1188
      %v1333 = vpop.f32.mrb[0].mxu0
      %v1334 = vadd.f32 %v1143, %v1333
      %v1335 = vpop.f32.mrb[0].mxu0
      %v1336 = vpop.f32.mrb[0].mxu0
      %v1337 = vadd.f32 %v1143, %v1336
      %v1338 = vpop.f32.mrb[0].mxu0
      %1339 = vmatprep.mubr.bf16.mxu0 0
      %1340 = vmatmul.mubr.bf16.gmra.mrb[0].mxu0 %v1191
      %v1341 = vpop.f32.mrb[0].mxu0
      %v1342 = vadd.f32 %v1143, %v1341
      %v1343 = vpop.f32.mrb[0].mxu0
      %v1344 = vpop.f32.mrb[0].mxu0
      %v1345 = vadd.f32 %v1143, %v1344
      %v1346 = vpop.f32.mrb[0].mxu0
      %1347 = vmatprep.mubr.bf16.mxu0 0
      %1348 = vmatmul.mubr.bf16.gmra.mrb[0].mxu0 %v1194
      %v1349 = vpop.f32.mrb[0].mxu0
      %v1350 = vadd.f32 %v1143, %v1349
      %v1351 = vpop.f32.mrb[0].mxu0
      %v1352 = vpop.f32.mrb[0].mxu0
      %v1353 = vadd.f32 %v1143, %v1352
      %v1354 = vpop.f32.mrb[0].mxu0
      %1355 = vmatprep.mubr.bf16.mxu0 0
      %1356 = vmatmul.mubr.bf16.gmra.mrb[0].mxu0 %v1197
      %v1357 = vpop.f32.mrb[0].mxu0
      %v1358 = vadd.f32 %v1143, %v1357
      %v1359 = vpop.f32.mrb[0].mxu0
      %v1360 = vpop.f32.mrb[0].mxu0
      %v1361 = vadd.f32 %v1143, %v1360
      %v1362 = vpop.f32.mrb[0].mxu0
      %1363 = vdwg.mxu0
      %v1364 = vld [vmem:[%s710] sm:$0xff]
      %v1365 = vld [vmem:[%s710 + $0x8] sm:$0xff]
      %v1366 = vld [vmem:[%s710 + $0x10] sm:$0xff]
      %v1367 = vld [vmem:[%s710 + $0x18] sm:$0xff]
      %v1368 = vld [vmem:[%s710 + $0x20] sm:$0xff]
      %v1369 = vld [vmem:[%s710 + $0x28] sm:$0xff]
      %v1370 = vld [vmem:[%s710 + $0x30] sm:$0xff]
      %v1371 = vld [vmem:[%s710 + $0x38] sm:$0xff]
      %v1372 = vld [vmem:[%s710 + $0x40] sm:$0xff]
      %v1373 = vld [vmem:[%s710 + $0x48] sm:$0xff]
      %v1374 = vld [vmem:[%s710 + $0x50] sm:$0xff]
      %v1375 = vld [vmem:[%s710 + $0x58] sm:$0xff]
      %v1376 = vld [vmem:[%s710 + $0x60] sm:$0xff]
      %v1377 = vld [vmem:[%s710 + $0x68] sm:$0xff]
      %v1378 = vld [vmem:[%s710 + $0x70] sm:$0xff]
      %v1379 = vld [vmem:[%s710 + $0x78] sm:$0xff]
      %v1382 = vunpack.c.l.b16 %v1118
      %v1383 = vunpack.c.l.b16 %v1119
      %v1384 = vpack.c.b16 %v1383, %v1382
      %v1386 = vsel %vm1150, %v1364, 0
      %v1389 = vsel %vm1150, %v1365, 0
      %v1392 = vsel %vm1150, %v1366, 0
      %v1395 = vsel %vm1150, %v1367, 0
      %v1398 = vsel %vm1150, %v1368, 0
      %v1401 = vsel %vm1150, %v1369, 0
      %v1404 = vsel %vm1150, %v1370, 0
      %v1407 = vsel %vm1150, %v1371, 0
      %v1410 = vsel %vm1150, %v1372, 0
      %v1413 = vsel %vm1150, %v1373, 0
      %v1416 = vsel %vm1150, %v1374, 0
      %v1419 = vsel %vm1150, %v1375, 0
      %v1422 = vsel %vm1150, %v1376, 0
      %v1425 = vsel %vm1150, %v1377, 0
      %v1428 = vsel %vm1150, %v1378, 0
      %v1431 = vsel %vm1150, %v1379, 0
      %v1434 = vsel %vm1199, %v1384, 0
      %1436 = vmatprep.subr.bf16.mxu0 0
      %1437 = vmatpush1.bf16.msra.mxu0 %v1434
      %1438 = vmatprep.subr.bf16.mxu0 0
      %1439 = vmatpush1.bf16.msra.mxu0 0
      %1440 = vmatprep.subr.bf16.mxu0 0
      %1441 = vmatpush1.bf16.msra.mxu0 0
      %1442 = vmatprep.subr.bf16.mxu0 0
      %1443 = vmatpush1.bf16.msra.mxu0 0
      %1444 = vmatprep.subr.bf16.mxu0 0
      %1445 = vmatpush1.bf16.msra.mxu0 0
      %1446 = vmatprep.subr.bf16.mxu0 0
      %1447 = vmatpush1.bf16.msra.mxu0 0
      %1448 = vmatprep.subr.bf16.mxu0 0
      %1449 = vmatpush1.bf16.msra.mxu0 0
      %1450 = vmatprep.subr.bf16.mxu0 0
      %1451 = vmatpush1.bf16.msra.mxu0 0
      %1452 = vmatprep.subr.bf16.mxu0 0
      %1453 = vmatpush1.bf16.msra.mxu0 0
      %1454 = vmatprep.subr.bf16.mxu0 0
      %1455 = vmatpush1.bf16.msra.mxu0 0
      %1456 = vmatprep.subr.bf16.mxu0 0
      %1457 = vmatpush1.bf16.msra.mxu0 0
      %1458 = vmatprep.subr.bf16.mxu0 0
      %1459 = vmatpush1.bf16.msra.mxu0 0
      %1460 = vmatprep.subr.bf16.mxu0 0
      %1461 = vmatpush1.bf16.msra.mxu0 0
      %1462 = vmatprep.subr.bf16.mxu0 0
      %1463 = vmatpush1.bf16.msra.mxu0 0
      %1464 = vmatprep.subr.bf16.mxu0 0
      %1465 = vmatpush1.bf16.msra.mxu0 0
      %1466 = vmatprep.subr.bf16.mxu0 0
      %1467 = vmatpush1.bf16.msra.mxu0 0
      %1468 = vmatprep.mubr.bf16.mxu0 0
      %1469 = vmatmul.mubr.bf16.gmra.mrb[0].mxu0 %v1386
      %v1470 = vpop.f32.mrb[0].mxu0
      %v1471 = vadd.f32 0.0, %v1470
      %v1472 = vpop.f32.mrb[0].mxu0
      %v1473 = vpop.f32.mrb[0].mxu0
      %v1474 = vadd.f32 0.0, %v1473
      %v1475 = vpop.f32.mrb[0].mxu0
      %1476 = vmatprep.mubr.bf16.mxu0 0
      %1477 = vmatmul.mubr.bf16.gmra.mrb[0].mxu0 %v1389
      %v1478 = vpop.f32.mrb[0].mxu0
      %v1479 = vadd.f32 0.0, %v1478
      %v1480 = vpop.f32.mrb[0].mxu0
      %v1481 = vpop.f32.mrb[0].mxu0
      %v1482 = vadd.f32 0.0, %v1481
      %v1483 = vpop.f32.mrb[0].mxu0
      %1484 = vmatprep.mubr.bf16.mxu0 0
      %1485 = vmatmul.mubr.bf16.gmra.mrb[0].mxu0 %v1392
      %v1486 = vpop.f32.mrb[0].mxu0
      %v1487 = vadd.f32 0.0, %v1486
      %v1488 = vpop.f32.mrb[0].mxu0
      %v1489 = vpop.f32.mrb[0].mxu0
      %v1490 = vadd.f32 0.0, %v1489
      %v1491 = vpop.f32.mrb[0].mxu0
      %1492 = vmatprep.mubr.bf16.mxu0 0
      %1493 = vmatmul.mubr.bf16.gmra.mrb[0].mxu0 %v1395
      %v1494 = vpop.f32.mrb[0].mxu0
      %v1495 = vadd.f32 0.0, %v1494
      %v1496 = vpop.f32.mrb[0].mxu0
      %v1497 = vpop.f32.mrb[0].mxu0
      %v1498 = vadd.f32 0.0, %v1497
      %v1499 = vpop.f32.mrb[0].mxu0
      %1500 = vmatprep.mubr.bf16.mxu0 0
      %1501 = vmatmul.mubr.bf16.gmra.mrb[0].mxu0 %v1398
      %v1502 = vpop.f32.mrb[0].mxu0
      %v1503 = vadd.f32 0.0, %v1502
      %v1504 = vpop.f32.mrb[0].mxu0
      %v1505 = vpop.f32.mrb[0].mxu0
      %v1506 = vadd.f32 0.0, %v1505
      %v1507 = vpop.f32.mrb[0].mxu0
      %1508 = vmatprep.mubr.bf16.mxu0 0
      %1509 = vmatmul.mubr.bf16.gmra.mrb[0].mxu0 %v1401
      %v1510 = vpop.f32.mrb[0].mxu0
      %v1511 = vadd.f32 0.0, %v1510
      %v1512 = vpop.f32.mrb[0].mxu0
      %v1513 = vpop.f32.mrb[0].mxu0
      %v1514 = vadd.f32 0.0, %v1513
      %v1515 = vpop.f32.mrb[0].mxu0
      %1516 = vmatprep.mubr.bf16.mxu0 0
      %1517 = vmatmul.mubr.bf16.gmra.mrb[0].mxu0 %v1404
      %v1518 = vpop.f32.mrb[0].mxu0
      %v1519 = vadd.f32 0.0, %v1518
      %v1520 = vpop.f32.mrb[0].mxu0
      %v1521 = vpop.f32.mrb[0].mxu0
      %v1522 = vadd.f32 0.0, %v1521
      %v1523 = vpop.f32.mrb[0].mxu0
      %1524 = vmatprep.mubr.bf16.mxu0 0
      %1525 = vmatmul.mubr.bf16.gmra.mrb[0].mxu0 %v1407
      %v1526 = vpop.f32.mrb[0].mxu0
      %v1527 = vadd.f32 0.0, %v1526
      %v1528 = vpop.f32.mrb[0].mxu0
      %v1529 = vpop.f32.mrb[0].mxu0
      %v1530 = vadd.f32 0.0, %v1529
      %v1531 = vpop.f32.mrb[0].mxu0
      %1532 = vmatprep.mubr.bf16.mxu0 0
      %1533 = vmatmul.mubr.bf16.gmra.mrb[0].mxu0 %v1410
      %v1534 = vpop.f32.mrb[0].mxu0
      %v1535 = vadd.f32 0.0, %v1534
      %v1536 = vpop.f32.mrb[0].mxu0
      %v1537 = vpop.f32.mrb[0].mxu0
      %v1538 = vadd.f32 0.0, %v1537
      %v1539 = vpop.f32.mrb[0].mxu0
      %1540 = vmatprep.mubr.bf16.mxu0 0
      %1541 = vmatmul.mubr.bf16.gmra.mrb[0].mxu0 %v1413
      %v1542 = vpop.f32.mrb[0].mxu0
      %v1543 = vadd.f32 0.0, %v1542
      %v1544 = vpop.f32.mrb[0].mxu0
      %v1545 = vpop.f32.mrb[0].mxu0
      %v1546 = vadd.f32 0.0, %v1545
      %v1547 = vpop.f32.mrb[0].mxu0
      %1548 = vmatprep.mubr.bf16.mxu0 0
      %1549 = vmatmul.mubr.bf16.gmra.mrb[0].mxu0 %v1416
      %v1550 = vpop.f32.mrb[0].mxu0
      %v1551 = vadd.f32 0.0, %v1550
      %v1552 = vpop.f32.mrb[0].mxu0
      %v1553 = vpop.f32.mrb[0].mxu0
      %v1554 = vadd.f32 0.0, %v1553
      %v1555 = vpop.f32.mrb[0].mxu0
      %1556 = vmatprep.mubr.bf16.mxu0 0
      %1557 = vmatmul.mubr.bf16.gmra.mrb[0].mxu0 %v1419
      %v1558 = vpop.f32.mrb[0].mxu0
      %v1559 = vadd.f32 0.0, %v1558
      %v1560 = vpop.f32.mrb[0].mxu0
      %v1561 = vpop.f32.mrb[0].mxu0
      %v1562 = vadd.f32 0.0, %v1561
      %v1563 = vpop.f32.mrb[0].mxu0
      %1564 = vmatprep.mubr.bf16.mxu0 0
      %1565 = vmatmul.mubr.bf16.gmra.mrb[0].mxu0 %v1422
      %v1566 = vpop.f32.mrb[0].mxu0
      %v1567 = vadd.f32 0.0, %v1566
      %v1568 = vpop.f32.mrb[0].mxu0
      %v1569 = vpop.f32.mrb[0].mxu0
      %v1570 = vadd.f32 0.0, %v1569
      %v1571 = vpop.f32.mrb[0].mxu0
      %1572 = vmatprep.mubr.bf16.mxu0 0
      %1573 = vmatmul.mubr.bf16.gmra.mrb[0].mxu0 %v1425
      %v1574 = vpop.f32.mrb[0].mxu0
      %v1575 = vadd.f32 0.0, %v1574
      %v1576 = vpop.f32.mrb[0].mxu0
      %v1577 = vpop.f32.mrb[0].mxu0
      %v1578 = vadd.f32 0.0, %v1577
      %v1579 = vpop.f32.mrb[0].mxu0
      %1580 = vmatprep.mubr.bf16.mxu0 0
      %1581 = vmatmul.mubr.bf16.gmra.mrb[0].mxu0 %v1428
      %v1582 = vpop.f32.mrb[0].mxu0
      %v1583 = vadd.f32 0.0, %v1582
      %v1584 = vpop.f32.mrb[0].mxu0
      %v1585 = vpop.f32.mrb[0].mxu0
      %v1586 = vadd.f32 0.0, %v1585
      %v1587 = vpop.f32.mrb[0].mxu0
      %1588 = vmatprep.mubr.bf16.mxu0 0
      %1589 = vmatmul.mubr.bf16.gmra.mrb[0].mxu0 %v1431
      %v1590 = vpop.f32.mrb[0].mxu0
      %v1591 = vadd.f32 0.0, %v1590
      %v1592 = vpop.f32.mrb[0].mxu0
      %v1593 = vpop.f32.mrb[0].mxu0
      %v1594 = vadd.f32 0.0, %v1593
      %v1595 = vpop.f32.mrb[0].mxu0
      %1596 = vdwg.mxu0
      %v1597 = vadd.f32 %v1238, %v1471
      %v1598 = vadd.f32 %v1241, %v1474
      %v1599 = vadd.f32 %v1246, %v1479
      %v1600 = vadd.f32 %v1249, %v1482
      %v1601 = vadd.f32 %v1254, %v1487
      %v1602 = vadd.f32 %v1257, %v1490
      %v1603 = vadd.f32 %v1262, %v1495
      %v1604 = vadd.f32 %v1265, %v1498
      %v1605 = vadd.f32 %v1270, %v1503
      %v1606 = vadd.f32 %v1273, %v1506
      %v1607 = vadd.f32 %v1278, %v1511
      %v1608 = vadd.f32 %v1281, %v1514
      %v1609 = vadd.f32 %v1286, %v1519
      %v1610 = vadd.f32 %v1289, %v1522
      %v1611 = vadd.f32 %v1294, %v1527
      %v1612 = vadd.f32 %v1297, %v1530
      %v1613 = vadd.f32 %v1302, %v1535
      %v1614 = vadd.f32 %v1305, %v1538
      %v1615 = vadd.f32 %v1310, %v1543
      %v1616 = vadd.f32 %v1313, %v1546
      %v1617 = vadd.f32 %v1318, %v1551
      %v1618 = vadd.f32 %v1321, %v1554
      %v1619 = vadd.f32 %v1326, %v1559
      %v1620 = vadd.f32 %v1329, %v1562
      %v1621 = vadd.f32 %v1334, %v1567
      %v1622 = vadd.f32 %v1337, %v1570
      %v1623 = vadd.f32 %v1342, %v1575
      %v1624 = vadd.f32 %v1345, %v1578
      %v1625 = vadd.f32 %v1350, %v1583
      %v1626 = vadd.f32 %v1353, %v1586
      %v1627 = vadd.f32 %v1358, %v1591
      %v1628 = vadd.f32 %v1361, %v1594
      %s1629 = scalar_lea.vmem [#allocation2], 16
      %v1630 = vld [vmem:[%s1629] sm:$0xff]
      %v1631 = vld [vmem:[%s1629 + $0x8] sm:$0xff]
      %v1632 = vld [vmem:[%s1629 + $0x10] sm:$0xff]
      %v1633 = vld [vmem:[%s1629 + $0x18] sm:$0xff]
      %v1634 = vld [vmem:[%s1629 + $0x20] sm:$0xff]
      %v1635 = vld [vmem:[%s1629 + $0x28] sm:$0xff]
      %v1636 = vld [vmem:[%s1629 + $0x30] sm:$0xff]
      %v1637 = vld [vmem:[%s1629 + $0x38] sm:$0xff]
      %v1638 = vld [vmem:[%s1629 + $0x40] sm:$0xff]
      %v1639 = vld [vmem:[%s1629 + $0x48] sm:$0xff]
      %v1640 = vld [vmem:[%s1629 + $0x50] sm:$0xff]
      %v1641 = vld [vmem:[%s1629 + $0x58] sm:$0xff]
      %v1642 = vld [vmem:[%s1629 + $0x60] sm:$0xff]
      %v1643 = vld [vmem:[%s1629 + $0x68] sm:$0xff]
      %v1644 = vld [vmem:[%s1629 + $0x70] sm:$0xff]
      %v1645 = vld [vmem:[%s1629 + $0x78] sm:$0xff]
      %v1648 = vunpack.c.l.b16 %v1120
      %v1649 = vunpack.c.l.b16 %v1121
      %v1650 = vpack.c.b16 %v1649, %v1648
      %v1652 = vsel %vm1150, %v1630, 0
      %v1655 = vsel %vm1150, %v1631, 0
      %v1658 = vsel %vm1150, %v1632, 0
      %v1661 = vsel %vm1150, %v1633, 0
      %v1664 = vsel %vm1150, %v1634, 0
      %v1667 = vsel %vm1150, %v1635, 0
      %v1670 = vsel %vm1150, %v1636, 0
      %v1673 = vsel %vm1150, %v1637, 0
      %v1676 = vsel %vm1150, %v1638, 0
      %v1679 = vsel %vm1150, %v1639, 0
      %v1682 = vsel %vm1150, %v1640, 0
      %v1685 = vsel %vm1150, %v1641, 0
      %v1688 = vsel %vm1150, %v1642, 0
      %v1691 = vsel %vm1150, %v1643, 0
      %v1694 = vsel %vm1150, %v1644, 0
      %v1697 = vsel %vm1150, %v1645, 0
      %v1700 = vsel %vm1199, %v1650, 0
      %1702 = vmatprep.subr.bf16.mxu0 0
      %1703 = vmatpush1.bf16.msra.mxu0 %v1700
      %1704 = vmatprep.subr.bf16.mxu0 0
      %1705 = vmatpush1.bf16.msra.mxu0 0
      %1706 = vmatprep.subr.bf16.mxu0 0
      %1707 = vmatpush1.bf16.msra.mxu0 0
      %1708 = vmatprep.subr.bf16.mxu0 0
      %1709 = vmatpush1.bf16.msra.mxu0 0
      %1710 = vmatprep.subr.bf16.mxu0 0
      %1711 = vmatpush1.bf16.msra.mxu0 0
      %1712 = vmatprep.subr.bf16.mxu0 0
      %1713 = vmatpush1.bf16.msra.mxu0 0
      %1714 = vmatprep.subr.bf16.mxu0 0
      %1715 = vmatpush1.bf16.msra.mxu0 0
      %1716 = vmatprep.subr.bf16.mxu0 0
      %1717 = vmatpush1.bf16.msra.mxu0 0
      %1718 = vmatprep.subr.bf16.mxu0 0
      %1719 = vmatpush1.bf16.msra.mxu0 0
      %1720 = vmatprep.subr.bf16.mxu0 0
      %1721 = vmatpush1.bf16.msra.mxu0 0
      %1722 = vmatprep.subr.bf16.mxu0 0
      %1723 = vmatpush1.bf16.msra.mxu0 0
      %1724 = vmatprep.subr.bf16.mxu0 0
      %1725 = vmatpush1.bf16.msra.mxu0 0
      %1726 = vmatprep.subr.bf16.mxu0 0
      %1727 = vmatpush1.bf16.msra.mxu0 0
      %1728 = vmatprep.subr.bf16.mxu0 0
      %1729 = vmatpush1.bf16.msra.mxu0 0
      %1730 = vmatprep.subr.bf16.mxu0 0
      %1731 = vmatpush1.bf16.msra.mxu0 0
      %1732 = vmatprep.subr.bf16.mxu0 0
      %1733 = vmatpush1.bf16.msra.mxu0 0
      %1734 = vmatprep.mubr.bf16.mxu0 0
      %1735 = vmatmul.mubr.bf16.gmra.mrb[0].mxu0 %v1652
      %v1736 = vpop.f32.mrb[0].mxu0
      %v1737 = vadd.f32 0.0, %v1736
      %v1738 = vpop.f32.mrb[0].mxu0
      %v1739 = vpop.f32.mrb[0].mxu0
      %v1740 = vadd.f32 0.0, %v1739
      %v1741 = vpop.f32.mrb[0].mxu0
      %1742 = vmatprep.mubr.bf16.mxu0 0
      %1743 = vmatmul.mubr.bf16.gmra.mrb[0].mxu0 %v1655
      %v1744 = vpop.f32.mrb[0].mxu0
      %v1745 = vadd.f32 0.0, %v1744
      %v1746 = vpop.f32.mrb[0].mxu0
      %v1747 = vpop.f32.mrb[0].mxu0
      %v1748 = vadd.f32 0.0, %v1747
      %v1749 = vpop.f32.mrb[0].mxu0
      %1750 = vmatprep.mubr.bf16.mxu0 0
      %1751 = vmatmul.mubr.bf16.gmra.mrb[0].mxu0 %v1658
      %v1752 = vpop.f32.mrb[0].mxu0
      %v1753 = vadd.f32 0.0, %v1752
      %v1754 = vpop.f32.mrb[0].mxu0
      %v1755 = vpop.f32.mrb[0].mxu0
      %v1756 = vadd.f32 0.0, %v1755
      %v1757 = vpop.f32.mrb[0].mxu0
      %1758 = vmatprep.mubr.bf16.mxu0 0
      %1759 = vmatmul.mubr.bf16.gmra.mrb[0].mxu0 %v1661
      %v1760 = vpop.f32.mrb[0].mxu0
      %v1761 = vadd.f32 0.0, %v1760
      %v1762 = vpop.f32.mrb[0].mxu0
      %v1763 = vpop.f32.mrb[0].mxu0
      %v1764 = vadd.f32 0.0, %v1763
      %v1765 = vpop.f32.mrb[0].mxu0
      %1766 = vmatprep.mubr.bf16.mxu0 0
      %1767 = vmatmul.mubr.bf16.gmra.mrb[0].mxu0 %v1664
      %v1768 = vpop.f32.mrb[0].mxu0
      %v1769 = vadd.f32 0.0, %v1768
      %v1770 = vpop.f32.mrb[0].mxu0
      %v1771 = vpop.f32.mrb[0].mxu0
      %v1772 = vadd.f32 0.0, %v1771
      %v1773 = vpop.f32.mrb[0].mxu0
      %1774 = vmatprep.mubr.bf16.mxu0 0
      %1775 = vmatmul.mubr.bf16.gmra.mrb[0].mxu0 %v1667
      %v1776 = vpop.f32.mrb[0].mxu0
      %v1777 = vadd.f32 0.0, %v1776
      %v1778 = vpop.f32.mrb[0].mxu0
      %v1779 = vpop.f32.mrb[0].mxu0
      %v1780 = vadd.f32 0.0, %v1779
      %v1781 = vpop.f32.mrb[0].mxu0
      %1782 = vmatprep.mubr.bf16.mxu0 0
      %1783 = vmatmul.mubr.bf16.gmra.mrb[0].mxu0 %v1670
      %v1784 = vpop.f32.mrb[0].mxu0
      %v1785 = vadd.f32 0.0, %v1784
      %v1786 = vpop.f32.mrb[0].mxu0
      %v1787 = vpop.f32.mrb[0].mxu0
      %v1788 = vadd.f32 0.0, %v1787
      %v1789 = vpop.f32.mrb[0].mxu0
      %1790 = vmatprep.mubr.bf16.mxu0 0
      %1791 = vmatmul.mubr.bf16.gmra.mrb[0].mxu0 %v1673
      %v1792 = vpop.f32.mrb[0].mxu0
      %v1793 = vadd.f32 0.0, %v1792
      %v1794 = vpop.f32.mrb[0].mxu0
      %v1795 = vpop.f32.mrb[0].mxu0
      %v1796 = vadd.f32 0.0, %v1795
      %v1797 = vpop.f32.mrb[0].mxu0
      %1798 = vmatprep.mubr.bf16.mxu0 0
      %1799 = vmatmul.mubr.bf16.gmra.mrb[0].mxu0 %v1676
      %v1800 = vpop.f32.mrb[0].mxu0
      %v1801 = vadd.f32 0.0, %v1800
      %v1802 = vpop.f32.mrb[0].mxu0
      %v1803 = vpop.f32.mrb[0].mxu0
      %v1804 = vadd.f32 0.0, %v1803
      %v1805 = vpop.f32.mrb[0].mxu0
      %1806 = vmatprep.mubr.bf16.mxu0 0
      %1807 = vmatmul.mubr.bf16.gmra.mrb[0].mxu0 %v1679
      %v1808 = vpop.f32.mrb[0].mxu0
      %v1809 = vadd.f32 0.0, %v1808
      %v1810 = vpop.f32.mrb[0].mxu0
      %v1811 = vpop.f32.mrb[0].mxu0
      %v1812 = vadd.f32 0.0, %v1811
      %v1813 = vpop.f32.mrb[0].mxu0
      %1814 = vmatprep.mubr.bf16.mxu0 0
      %1815 = vmatmul.mubr.bf16.gmra.mrb[0].mxu0 %v1682
      %v1816 = vpop.f32.mrb[0].mxu0
      %v1817 = vadd.f32 0.0, %v1816
      %v1818 = vpop.f32.mrb[0].mxu0
      %v1819 = vpop.f32.mrb[0].mxu0
      %v1820 = vadd.f32 0.0, %v1819
      %v1821 = vpop.f32.mrb[0].mxu0
      %1822 = vmatprep.mubr.bf16.mxu0 0
      %1823 = vmatmul.mubr.bf16.gmra.mrb[0].mxu0 %v1685
      %v1824 = vpop.f32.mrb[0].mxu0
      %v1825 = vadd.f32 0.0, %v1824
      %v1826 = vpop.f32.mrb[0].mxu0
      %v1827 = vpop.f32.mrb[0].mxu0
      %v1828 = vadd.f32 0.0, %v1827
      %v1829 = vpop.f32.mrb[0].mxu0
      %1830 = vmatprep.mubr.bf16.mxu0 0
      %1831 = vmatmul.mubr.bf16.gmra.mrb[0].mxu0 %v1688
      %v1832 = vpop.f32.mrb[0].mxu0
      %v1833 = vadd.f32 0.0, %v1832
      %v1834 = vpop.f32.mrb[0].mxu0
      %v1835 = vpop.f32.mrb[0].mxu0
      %v1836 = vadd.f32 0.0, %v1835
      %v1837 = vpop.f32.mrb[0].mxu0
      %1838 = vmatprep.mubr.bf16.mxu0 0
      %1839 = vmatmul.mubr.bf16.gmra.mrb[0].mxu0 %v1691
      %v1840 = vpop.f32.mrb[0].mxu0
      %v1841 = vadd.f32 0.0, %v1840
      %v1842 = vpop.f32.mrb[0].mxu0
      %v1843 = vpop.f32.mrb[0].mxu0
      %v1844 = vadd.f32 0.0, %v1843
      %v1845 = vpop.f32.mrb[0].mxu0
      %1846 = vmatprep.mubr.bf16.mxu0 0
      %1847 = vmatmul.mubr.bf16.gmra.mrb[0].mxu0 %v1694
      %v1848 = vpop.f32.mrb[0].mxu0
      %v1849 = vadd.f32 0.0, %v1848
      %v1850 = vpop.f32.mrb[0].mxu0
      %v1851 = vpop.f32.mrb[0].mxu0
      %v1852 = vadd.f32 0.0, %v1851
      %v1853 = vpop.f32.mrb[0].mxu0
      %1854 = vmatprep.mubr.bf16.mxu0 0
      %1855 = vmatmul.mubr.bf16.gmra.mrb[0].mxu0 %v1697
      %v1856 = vpop.f32.mrb[0].mxu0
      %v1857 = vadd.f32 0.0, %v1856
      %v1858 = vpop.f32.mrb[0].mxu0
      %v1859 = vpop.f32.mrb[0].mxu0
      %v1860 = vadd.f32 0.0, %v1859
      %v1861 = vpop.f32.mrb[0].mxu0
      %1862 = vdwg.mxu0
      %v1863 = vadd.f32 %v1597, %v1737
      %v1864 = vadd.f32 %v1598, %v1740
      %v1865 = vadd.f32 %v1599, %v1745
      %v1866 = vadd.f32 %v1600, %v1748
      %v1867 = vadd.f32 %v1601, %v1753
      %v1868 = vadd.f32 %v1602, %v1756
      %v1869 = vadd.f32 %v1603, %v1761
      %v1870 = vadd.f32 %v1604, %v1764
      %v1871 = vadd.f32 %v1605, %v1769
      %v1872 = vadd.f32 %v1606, %v1772
      %v1873 = vadd.f32 %v1607, %v1777
      %v1874 = vadd.f32 %v1608, %v1780
      %v1875 = vadd.f32 %v1609, %v1785
      %v1876 = vadd.f32 %v1610, %v1788
      %v1877 = vadd.f32 %v1611, %v1793
      %v1878 = vadd.f32 %v1612, %v1796
      %v1879 = vadd.f32 %v1613, %v1801
      %v1880 = vadd.f32 %v1614, %v1804
      %v1881 = vadd.f32 %v1615, %v1809
      %v1882 = vadd.f32 %v1616, %v1812
      %v1883 = vadd.f32 %v1617, %v1817
      %v1884 = vadd.f32 %v1618, %v1820
      %v1885 = vadd.f32 %v1619, %v1825
      %v1886 = vadd.f32 %v1620, %v1828
      %v1887 = vadd.f32 %v1621, %v1833
      %v1888 = vadd.f32 %v1622, %v1836
      %v1889 = vadd.f32 %v1623, %v1841
      %v1890 = vadd.f32 %v1624, %v1844
      %v1891 = vadd.f32 %v1625, %v1849
      %v1892 = vadd.f32 %v1626, %v1852
      %v1893 = vadd.f32 %v1627, %v1857
      %v1894 = vadd.f32 %v1628, %v1860
      %v1895 = vmax.f32 %v1863, 0.0
      %v1896 = vmax.f32 %v1864, 0.0
      %v1897 = vmax.f32 %v1865, 0.0
      %v1898 = vmax.f32 %v1866, 0.0
      %v1899 = vmax.f32 %v1867, 0.0
      %v1900 = vmax.f32 %v1868, 0.0
      %v1901 = vmax.f32 %v1869, 0.0
      %v1902 = vmax.f32 %v1870, 0.0
      %v1903 = vmax.f32 %v1871, 0.0
      %v1904 = vmax.f32 %v1872, 0.0
      %v1905 = vmax.f32 %v1873, 0.0
      %v1906 = vmax.f32 %v1874, 0.0
      %v1907 = vmax.f32 %v1875, 0.0
      %v1908 = vmax.f32 %v1876, 0.0
      %v1909 = vmax.f32 %v1877, 0.0
      %v1910 = vmax.f32 %v1878, 0.0
      %v1911 = vmax.f32 %v1879, 0.0
      %v1912 = vmax.f32 %v1880, 0.0
      %v1913 = vmax.f32 %v1881, 0.0
      %v1914 = vmax.f32 %v1882, 0.0
      %v1915 = vmax.f32 %v1883, 0.0
      %v1916 = vmax.f32 %v1884, 0.0
      %v1917 = vmax.f32 %v1885, 0.0
      %v1918 = vmax.f32 %v1886, 0.0
      %v1919 = vmax.f32 %v1887, 0.0
      %v1920 = vmax.f32 %v1888, 0.0
      %v1921 = vmax.f32 %v1889, 0.0
      %v1922 = vmax.f32 %v1890, 0.0
      %v1923 = vmax.f32 %v1891, 0.0
      %v1924 = vmax.f32 %v1892, 0.0
      %v1925 = vmax.f32 %v1893, 0.0
      %v1926 = vmax.f32 %v1894, 0.0
      %v1927 = vpack.c.bf16 %v1896, %v1895
      %v1928 = vpack.c.bf16 %v1898, %v1897
      %v1929 = vpack.c.bf16 %v1900, %v1899
      %v1930 = vpack.c.bf16 %v1902, %v1901
      %v1931 = vpack.c.bf16 %v1904, %v1903
      %v1932 = vpack.c.bf16 %v1906, %v1905
      %v1933 = vpack.c.bf16 %v1908, %v1907
      %v1934 = vpack.c.bf16 %v1910, %v1909
      %v1935 = vpack.c.bf16 %v1912, %v1911
      %v1936 = vpack.c.bf16 %v1914, %v1913
      %v1937 = vpack.c.bf16 %v1916, %v1915
      %v1938 = vpack.c.bf16 %v1918, %v1917
      %v1939 = vpack.c.bf16 %v1920, %v1919
      %v1940 = vpack.c.bf16 %v1922, %v1921
      %v1941 = vpack.c.bf16 %v1924, %v1923
      %v1942 = vpack.c.bf16 %v1926, %v1925
      %v1943 = vld [vmem:[%s5] sm:$0x3]
      %v1944 = vld [vmem:[%s6] sm:$0x1]
      %v1946 = vlaneseq
      %v1947 = vshrl.u32 %v1946, 7
      %v1948 = vsub.s32 0, %v1947
      %v1949 = vrot.slane %v1944, %v1948
      %vm1951 = vcmask 31744
      %v1953 = vsel %vm1951, %v1927, 0
      %v1956 = vsel %vm1951, %v1928, 0
      %v1959 = vsel %vm1951, %v1929, 0
      %v1962 = vsel %vm1951, %v1930, 0
      %v1965 = vsel %vm1951, %v1931, 0
      %v1968 = vsel %vm1951, %v1932, 0
      %v1971 = vsel %vm1951, %v1933, 0
      %v1974 = vsel %vm1951, %v1934, 0
      %v1977 = vsel %vm1951, %v1935, 0
      %v1980 = vsel %vm1951, %v1936, 0
      %v1983 = vsel %vm1951, %v1937, 0
      %v1986 = vsel %vm1951, %v1938, 0
      %v1989 = vsel %vm1951, %v1939, 0
      %v1992 = vsel %vm1951, %v1940, 0
      %v1995 = vsel %vm1951, %v1941, 0
      %v1998 = vsel %vm1951, %v1942, 0
      %vm2000 = vcmask 1041408
      %v2002 = vsel %vm2000, %v1943, 0
      %2004 = vmatprep.subr.bf16.mxu0 0
      %2005 = vmatpush1.bf16.msra.mxu0 %v2002
      %2006 = vmatprep.subr.bf16.mxu0 0
      %2007 = vmatpush1.bf16.msra.mxu0 0
      %2008 = vmatprep.subr.bf16.mxu0 0
      %2009 = vmatpush1.bf16.msra.mxu0 0
      %2010 = vmatprep.subr.bf16.mxu0 0
      %2011 = vmatpush1.bf16.msra.mxu0 0
      %2012 = vmatprep.subr.bf16.mxu0 0
      %2013 = vmatpush1.bf16.msra.mxu0 0
      %2014 = vmatprep.subr.bf16.mxu0 0
      %2015 = vmatpush1.bf16.msra.mxu0 0
      %2016 = vmatprep.subr.bf16.mxu0 0
      %2017 = vmatpush1.bf16.msra.mxu0 0
      %2018 = vmatprep.subr.bf16.mxu0 0
      %2019 = vmatpush1.bf16.msra.mxu0 0
      %2020 = vmatprep.subr.bf16.mxu0 0
      %2021 = vmatpush1.bf16.msra.mxu0 0
      %2022 = vmatprep.subr.bf16.mxu0 0
      %2023 = vmatpush1.bf16.msra.mxu0 0
      %2024 = vmatprep.subr.bf16.mxu0 0
      %2025 = vmatpush1.bf16.msra.mxu0 0
      %2026 = vmatprep.subr.bf16.mxu0 0
      %2027 = vmatpush1.bf16.msra.mxu0 0
      %2028 = vmatprep.subr.bf16.mxu0 0
      %2029 = vmatpush1.bf16.msra.mxu0 0
      %2030 = vmatprep.subr.bf16.mxu0 0
      %2031 = vmatpush1.bf16.msra.mxu0 0
      %2032 = vmatprep.subr.bf16.mxu0 0
      %2033 = vmatpush1.bf16.msra.mxu0 0
      %2034 = vmatprep.subr.bf16.mxu0 0
      %2035 = vmatpush1.bf16.msra.mxu0 0
      %2036 = vmatprep.mubr.bf16.mxu0 0
      %2037 = vmatmul.mubr.bf16.gmra.mrb[0].mxu0 %v1953
      %v2038 = vpop.f32.mrb[0].mxu0
      %v2039 = vadd.f32 %v1949, %v2038
      %v2040 = vpop.f32.mrb[0].mxu0
      %v2041 = vpop.f32.mrb[0].mxu0
      %v2042 = vadd.f32 %v1949, %v2041
      %v2043 = vpop.f32.mrb[0].mxu0
      %2044 = vmatprep.mubr.bf16.mxu0 0
      %2045 = vmatmul.mubr.bf16.gmra.mrb[0].mxu0 %v1956
      %v2046 = vpop.f32.mrb[0].mxu0
      %v2047 = vadd.f32 %v1949, %v2046
      %v2048 = vpop.f32.mrb[0].mxu0
      %v2049 = vpop.f32.mrb[0].mxu0
      %v2050 = vadd.f32 %v1949, %v2049
      %v2051 = vpop.f32.mrb[0].mxu0
      %2052 = vmatprep.mubr.bf16.mxu0 0
      %2053 = vmatmul.mubr.bf16.gmra.mrb[0].mxu0 %v1959
      %v2054 = vpop.f32.mrb[0].mxu0
      %v2055 = vadd.f32 %v1949, %v2054
      %v2056 = vpop.f32.mrb[0].mxu0
      %v2057 = vpop.f32.mrb[0].mxu0
      %v2058 = vadd.f32 %v1949, %v2057
      %v2059 = vpop.f32.mrb[0].mxu0
      %2060 = vmatprep.mubr.bf16.mxu0 0
      %2061 = vmatmul.mubr.bf16.gmra.mrb[0].mxu0 %v1962
      %v2062 = vpop.f32.mrb[0].mxu0
      %v2063 = vadd.f32 %v1949, %v2062
      %v2064 = vpop.f32.mrb[0].mxu0
      %v2065 = vpop.f32.mrb[0].mxu0
      %v2066 = vadd.f32 %v1949, %v2065
      %v2067 = vpop.f32.mrb[0].mxu0
      %2068 = vmatprep.mubr.bf16.mxu0 0
      %2069 = vmatmul.mubr.bf16.gmra.mrb[0].mxu0 %v1965
      %v2070 = vpop.f32.mrb[0].mxu0
      %v2071 = vadd.f32 %v1949, %v2070
      %v2072 = vpop.f32.mrb[0].mxu0
      %v2073 = vpop.f32.mrb[0].mxu0
      %v2074 = vadd.f32 %v1949, %v2073
      %v2075 = vpop.f32.mrb[0].mxu0
      %2076 = vmatprep.mubr.bf16.mxu0 0
      %2077 = vmatmul.mubr.bf16.gmra.mrb[0].mxu0 %v1968
      %v2078 = vpop.f32.mrb[0].mxu0
      %v2079 = vadd.f32 %v1949, %v2078
      %v2080 = vpop.f32.mrb[0].mxu0
      %v2081 = vpop.f32.mrb[0].mxu0
      %v2082 = vadd.f32 %v1949, %v2081
      %v2083 = vpop.f32.mrb[0].mxu0
      %2084 = vmatprep.mubr.bf16.mxu0 0
      %2085 = vmatmul.mubr.bf16.gmra.mrb[0].mxu0 %v1971
      %v2086 = vpop.f32.mrb[0].mxu0
      %v2087 = vadd.f32 %v1949, %v2086
      %v2088 = vpop.f32.mrb[0].mxu0
      %v2089 = vpop.f32.mrb[0].mxu0
      %v2090 = vadd.f32 %v1949, %v2089
      %v2091 = vpop.f32.mrb[0].mxu0
      %2092 = vmatprep.mubr.bf16.mxu0 0
      %2093 = vmatmul.mubr.bf16.gmra.mrb[0].mxu0 %v1974
      %v2094 = vpop.f32.mrb[0].mxu0
      %v2095 = vadd.f32 %v1949, %v2094
      %v2096 = vpop.f32.mrb[0].mxu0
      %v2097 = vpop.f32.mrb[0].mxu0
      %v2098 = vadd.f32 %v1949, %v2097
      %v2099 = vpop.f32.mrb[0].mxu0
      %2100 = vmatprep.mubr.bf16.mxu0 0
      %2101 = vmatmul.mubr.bf16.gmra.mrb[0].mxu0 %v1977
      %v2102 = vpop.f32.mrb[0].mxu0
      %v2103 = vadd.f32 %v1949, %v2102
      %v2104 = vpop.f32.mrb[0].mxu0
      %v2105 = vpop.f32.mrb[0].mxu0
      %v2106 = vadd.f32 %v1949, %v2105
      %v2107 = vpop.f32.mrb[0].mxu0
      %2108 = vmatprep.mubr.bf16.mxu0 0
      %2109 = vmatmul.mubr.bf16.gmra.mrb[0].mxu0 %v1980
      %v2110 = vpop.f32.mrb[0].mxu0
      %v2111 = vadd.f32 %v1949, %v2110
      %v2112 = vpop.f32.mrb[0].mxu0
      %v2113 = vpop.f32.mrb[0].mxu0
      %v2114 = vadd.f32 %v1949, %v2113
      %v2115 = vpop.f32.mrb[0].mxu0
      %2116 = vmatprep.mubr.bf16.mxu0 0
      %2117 = vmatmul.mubr.bf16.gmra.mrb[0].mxu0 %v1983
      %v2118 = vpop.f32.mrb[0].mxu0
      %v2119 = vadd.f32 %v1949, %v2118
      %v2120 = vpop.f32.mrb[0].mxu0
      %v2121 = vpop.f32.mrb[0].mxu0
      %v2122 = vadd.f32 %v1949, %v2121
      %v2123 = vpop.f32.mrb[0].mxu0
      %2124 = vmatprep.mubr.bf16.mxu0 0
      %2125 = vmatmul.mubr.bf16.gmra.mrb[0].mxu0 %v1986
      %v2126 = vpop.f32.mrb[0].mxu0
      %v2127 = vadd.f32 %v1949, %v2126
      %v2128 = vpop.f32.mrb[0].mxu0
      %v2129 = vpop.f32.mrb[0].mxu0
      %v2130 = vadd.f32 %v1949, %v2129
      %v2131 = vpop.f32.mrb[0].mxu0
      %2132 = vmatprep.mubr.bf16.mxu0 0
      %2133 = vmatmul.mubr.bf16.gmra.mrb[0].mxu0 %v1989
      %v2134 = vpop.f32.mrb[0].mxu0
      %v2135 = vadd.f32 %v1949, %v2134
      %v2136 = vpop.f32.mrb[0].mxu0
      %v2137 = vpop.f32.mrb[0].mxu0
      %v2138 = vadd.f32 %v1949, %v2137
      %v2139 = vpop.f32.mrb[0].mxu0
      %2140 = vmatprep.mubr.bf16.mxu0 0
      %2141 = vmatmul.mubr.bf16.gmra.mrb[0].mxu0 %v1992
      %v2142 = vpop.f32.mrb[0].mxu0
      %v2143 = vadd.f32 %v1949, %v2142
      %v2144 = vpop.f32.mrb[0].mxu0
      %v2145 = vpop.f32.mrb[0].mxu0
      %v2146 = vadd.f32 %v1949, %v2145
      %v2147 = vpop.f32.mrb[0].mxu0
      %2148 = vmatprep.mubr.bf16.mxu0 0
      %2149 = vmatmul.mubr.bf16.gmra.mrb[0].mxu0 %v1995
      %v2150 = vpop.f32.mrb[0].mxu0
      %v2151 = vadd.f32 %v1949, %v2150
      %v2152 = vpop.f32.mrb[0].mxu0
      %v2153 = vpop.f32.mrb[0].mxu0
      %v2154 = vadd.f32 %v1949, %v2153
      %v2155 = vpop.f32.mrb[0].mxu0
      %2156 = vmatprep.mubr.bf16.mxu0 0
      %2157 = vmatmul.mubr.bf16.gmra.mrb[0].mxu0 %v1998
      %v2158 = vpop.f32.mrb[0].mxu0
      %v2159 = vadd.f32 %v1949, %v2158
      %v2160 = vpop.f32.mrb[0].mxu0
      %v2161 = vpop.f32.mrb[0].mxu0
      %v2162 = vadd.f32 %v1949, %v2161
      %v2163 = vpop.f32.mrb[0].mxu0
      %2164 = vdwg.mxu0
      %v2165 = vadd.f32 %v566, %v2039
      %v2166 = vadd.f32 %v567, %v2042
      %v2167 = vadd.f32 %v568, %v2047
      %v2168 = vadd.f32 %v569, %v2050
      %v2169 = vadd.f32 %v570, %v2055
      %v2170 = vadd.f32 %v571, %v2058
      %v2171 = vadd.f32 %v572, %v2063
      %v2172 = vadd.f32 %v573, %v2066
      %v2173 = vadd.f32 %v574, %v2071
      %v2174 = vadd.f32 %v575, %v2074
      %v2175 = vadd.f32 %v576, %v2079
      %v2176 = vadd.f32 %v577, %v2082
      %v2177 = vadd.f32 %v578, %v2087
      %v2178 = vadd.f32 %v579, %v2090
      %v2179 = vadd.f32 %v580, %v2095
      %v2180 = vadd.f32 %v581, %v2098
      %v2181 = vadd.f32 %v582, %v2103
      %v2182 = vadd.f32 %v583, %v2106
      %v2183 = vadd.f32 %v584, %v2111
      %v2184 = vadd.f32 %v585, %v2114
      %v2185 = vadd.f32 %v586, %v2119
      %v2186 = vadd.f32 %v587, %v2122
      %v2187 = vadd.f32 %v588, %v2127
      %v2188 = vadd.f32 %v589, %v2130
      %v2189 = vadd.f32 %v590, %v2135
      %v2190 = vadd.f32 %v591, %v2138
      %v2191 = vadd.f32 %v592, %v2143
      %v2192 = vadd.f32 %v593, %v2146
      %v2193 = vadd.f32 %v594, %v2151
      %v2194 = vadd.f32 %v595, %v2154
      %v2195 = vadd.f32 %v596, %v2159
      %v2196 = vadd.f32 %v597, %v2162
      %2197 = vst.msk [vmem:[%s445] sm:$0xff] %vm1951, %v2165
      %2198 = vst.msk [vmem:[%s445 + $0x8] sm:$0xff] %vm1951, %v2166
      %2199 = vst.msk [vmem:[%s445 + $0x10] sm:$0xff] %vm1951, %v2167
      %2200 = vst.msk [vmem:[%s445 + $0x18] sm:$0xff] %vm1951, %v2168
      %2201 = vst.msk [vmem:[%s445 + $0x20] sm:$0xff] %vm1951, %v2169
      %2202 = vst.msk [vmem:[%s445 + $0x28] sm:$0xff] %vm1951, %v2170
      %2203 = vst.msk [vmem:[%s445 + $0x30] sm:$0xff] %vm1951, %v2171
      %2204 = vst.msk [vmem:[%s445 + $0x38] sm:$0xff] %vm1951, %v2172
      %2205 = vst.msk [vmem:[%s445 + $0x40] sm:$0xff] %vm1951, %v2173
      %2206 = vst.msk [vmem:[%s445 + $0x48] sm:$0xff] %vm1951, %v2174
      %2207 = vst.msk [vmem:[%s445 + $0x50] sm:$0xff] %vm1951, %v2175
      %2208 = vst.msk [vmem:[%s445 + $0x58] sm:$0xff] %vm1951, %v2176
      %2209 = vst.msk [vmem:[%s445 + $0x60] sm:$0xff] %vm1951, %v2177
      %2210 = vst.msk [vmem:[%s445 + $0x68] sm:$0xff] %vm1951, %v2178
      %2211 = vst.msk [vmem:[%s445 + $0x70] sm:$0xff] %vm1951, %v2179
      %2212 = vst.msk [vmem:[%s445 + $0x78] sm:$0xff] %vm1951, %v2180
      %2213 = vst.msk [vmem:[%s445 + $0x80] sm:$0xff] %vm1951, %v2181
      %2214 = vst.msk [vmem:[%s445 + $0x88] sm:$0xff] %vm1951, %v2182
      %2215 = vst.msk [vmem:[%s445 + $0x90] sm:$0xff] %vm1951, %v2183
      %2216 = vst.msk [vmem:[%s445 + $0x98] sm:$0xff] %vm1951, %v2184
      %2217 = vst.msk [vmem:[%s445 + $0xa0] sm:$0xff] %vm1951, %v2185
      %2218 = vst.msk [vmem:[%s445 + $0xa8] sm:$0xff] %vm1951, %v2186
      %2219 = vst.msk [vmem:[%s445 + $0xb0] sm:$0xff] %vm1951, %v2187
      %2220 = vst.msk [vmem:[%s445 + $0xb8] sm:$0xff] %vm1951, %v2188
      %2221 = vst.msk [vmem:[%s445 + $0xc0] sm:$0xff] %vm1951, %v2189
      %2222 = vst.msk [vmem:[%s445 + $0xc8] sm:$0xff] %vm1951, %v2190
      %2223 = vst.msk [vmem:[%s445 + $0xd0] sm:$0xff] %vm1951, %v2191
      %2224 = vst.msk [vmem:[%s445 + $0xd8] sm:$0xff] %vm1951, %v2192
      %2225 = vst.msk [vmem:[%s445 + $0xe0] sm:$0xff] %vm1951, %v2193
      %2226 = vst.msk [vmem:[%s445 + $0xe8] sm:$0xff] %vm1951, %v2194
      %2227 = vst.msk [vmem:[%s445 + $0xf0] sm:$0xff] %vm1951, %v2195
      %2228 = vst.msk [vmem:[%s445 + $0xf8] sm:$0xff] %vm1951, %v2196
      %s2229 = smul.u32 16, %s23
      %p2230 = scmp.lt.s32.totalorder %s22, 1
      %s2231 = scalar_select %p2230, %s22, 1
      %p2232 = scmp.lt.s32.totalorder %s2229, 15
      %s2233 = scalar_select %p2232, %s2229, 15
      %s2234 = smul.addr %s2233, 2
      %s2235 = smul.addr %s2231, 32
      %s2236 = sadd.s32 %s2234, %s2235
      %s2237 = smul.addr %s2236, 8
      %s2238 = scalar_lea.vmem %s7, %s2237
      // Predicated region
      $region69: #{residual_block_forward.1} parent=47 // pred_check
        %p2239 = pneg %p234
      $region70: #{residual_block_forward.1} parent=47 // pred_check_branch
        %2241 = sbr.rel (%p2239) target = $region72
      $region71: #{residual_block_forward.1} parent=47 // pred_region
        %s2242 = smul.u32 16, %s23
      $region72: #{residual_block_forward.1} parent=47 // pred_fallthru
        _
    $region48: #{residual_block_forward.1} parent=5 // pred_fallthru
      _
    %p2243 = scmp.le.s32.totalorder 2, %s13
    // Predicated region
    $region73: #{residual_block_forward.1} parent=5 // pred_check
      %p2244 = pneg %p2243
    $region74: #{residual_block_forward.1} parent=5 // pred_check_branch
      %2246 = sbr.rel (%p2244) target = $region76
    $region75: #{residual_block_forward.1} parent=5 // pred_region
      %s2247 = ssub.s32 %s13, 2
      // Predicated region
      $region77: #{residual_block_forward.1} parent=75 // pred_check
        %p2248 = pneg %p240
      $region78: #{residual_block_forward.1} parent=75 // pred_check_branch
        %2250 = sbr.rel (%p2248) target = $region80
      $region79: #{residual_block_forward.1} parent=75 // pred_region
        %s2251 = smul.u32 16, %s25
        %p2252 = scmp.lt.s32.totalorder %s24, 1
        %s2253 = scalar_select %p2252, %s24, 1
        %p2254 = scmp.lt.s32.totalorder %s2251, 15
        %s2255 = scalar_select %p2254, %s2251, 15
        %s2256 = smul.addr %s2255, 2
        %s2257 = smul.addr %s2253, 32
        %s2258 = sadd.s32 %s2256, %s2257
        %s2259 = smul.addr %s2258, 8
        %s2260 = scalar_lea.vmem %s7, %s2259
      $region80: #{residual_block_forward.1} parent=75 // pred_fallthru
        _
    $region76: #{residual_block_forward.1} parent=5 // pred_fallthru
      _
  $region6: #{residual_block_forward.1} parent=0 // loop_footer
    %s17 = sadd.s32 1, %s13
  $region7: #{residual_block_forward.1} parent=0 // loop_footer_branch
    %12 = sbr.rel target = $region3
  $region8: #{residual_block_forward.1} parent=0 // loop_exit
    _

</llo_original>
